<compile_context>
chip_gen: v7x
topology: tpu7x:2x2x1
jax: 0.10.0
libtpu: 0.0.40
codegen_flags: <defaults>
</compile_context>

<pallas_src>
import jax
import jax.numpy as jnp
from jax.experimental import pallas as pl
from jax.experimental.pallas import tpu as pltpu


# ---------------- packed-slab row layout ----------------
# input slab: (IN_ROWS, N/128, 128)
_R_RATE = 0     # 3: angular rate (obs[:, 6:9])
_R_ACC = 3      # 3: base accelerometer
_R_RPY = 6      # 3: roll / pitch / yaw
_R_COMW = 9     # 3: com velocity, world frame (previous state)
_R_KFM = 12     # 3: KF posterior mean (previous state)
_R_FSUM = 15    # 3: Neumaier moving-window sum
_R_FCORR = 18   # 3: Neumaier correction
_R_FC = 21      # 4: foot contacts
_R_KFC = 25     # 9: KF posterior covariance (row-major 3x3)
_R_FV = 34      # 12: foot velocities, component-major (x f0..3, y f0..3, z f0..3)
_R_FP = 46      # 12: foot positions, component-major
_IN_ROWS = 58

# output slab: (OUT_ROWS, N/128, 128)
_O_VBODY = 0    # 3: body-frame com velocity   (forward() return #1)
_O_H = 3        # 1: base height               (forward() return #2)
_O_KFM = 4      # 3: new KF posterior mean
_O_KFC = 7      # 9: new KF posterior covariance
_O_FSUM = 16    # 3: new Neumaier sum
_O_FCORR = 19   # 3: new Neumaier correction
_O_COMW = 22    # 3: new com velocity, world frame
_OUT_ROWS = 25


def _vel_est_kernel(scal_ref, x_ref, o_ref):
    dt = scal_ref[0]          # delta_time
    stand_h = scal_ref[1]     # robot.stand_up_height
    inv_win = scal_ref[2]     # 1 / window_size
    q_var = scal_ref[3]       # process (accelerometer) variance
    r_var = scal_ref[4]       # measurement (sensor) variance

    # ---- rotation matrix from rpy (R = Rz(yaw) Ry(pitch) Rx(roll)) ----
    roll = x_ref[_R_RPY + 0]
    pitch = x_ref[_R_RPY + 1]
    yaw = x_ref[_R_RPY + 2]
    cr, sr = jnp.cos(roll), jnp.sin(roll)
    cp, sp = jnp.cos(pitch), jnp.sin(pitch)
    cy, sy = jnp.cos(yaw), jnp.sin(yaw)
    r00 = cy * cp
    r01 = cy * sp * sr - sy * cr
    r02 = cy * sp * cr + sy * sr
    r10 = sy * cp
    r11 = sy * sp * sr + cy * cr
    r12 = sy * sp * cr - cy * sr
    r20 = -sp
    r21 = cp * sr
    r22 = cp * cr

    # ---- calibrated acceleration (world frame, gravity removed) -> deltaV ----
    ax = x_ref[_R_ACC + 0]
    ay = x_ref[_R_ACC + 1]
    az = x_ref[_R_ACC + 2]
    dvx = (r00 * ax + r01 * ay + r02 * az) * dt
    dvy = (r10 * ax + r11 * ay + r12 * az) * dt
    dvz = (r20 * ax + r21 * ay + r22 * az - 9.81) * dt

    # ---- foot contacts ----
    fc = x_ref[_R_FC:_R_FC + 4]                    # (4, S, 128)
    contact = fc > 0.5
    nc = jnp.sum(fc, axis=0)                       # (S, 128) numContact
    any_contact = nc > 0.5
    weight = any_contact.astype(jnp.float32)
    one_m_w = 1.0 - weight
    # exact 1/numContact (numContact in {1..4}): constant select, no approx error
    inv_nc = jnp.where(nc > 3.5, 0.25,
             jnp.where(nc > 2.5, 1.0 / 3.0,
             jnp.where(nc > 1.5, 0.5, 1.0)))

    # ---- vB = footV + skew(rpyRate) @ footP, masked by contact ----
    wx = x_ref[_R_RATE + 0]
    wy = x_ref[_R_RATE + 1]
    wz = x_ref[_R_RATE + 2]
    fvx = x_ref[_R_FV + 0:_R_FV + 4]               # (4, S, 128)
    fvy = x_ref[_R_FV + 4:_R_FV + 8]
    fvz = x_ref[_R_FV + 8:_R_FV + 12]
    fpx = x_ref[_R_FP + 0:_R_FP + 4]
    fpy = x_ref[_R_FP + 4:_R_FP + 8]
    fpz = x_ref[_R_FP + 8:_R_FP + 12]
    zero = jnp.zeros_like(fvx)
    vbx = jnp.where(contact, fvx + (wy * fpz - wz * fpy), zero)
    vby = jnp.where(contact, fvy + (wz * fpx - wx * fpz), zero)
    vbz = jnp.where(contact, fvz + (wx * fpy - wy * fpx), zero)

    # ---- observed world velocity = sum_feet(-R @ vB) / numContact ----
    sumx = -jnp.sum(r00 * vbx + r01 * vby + r02 * vbz, axis=0)
    sumy = -jnp.sum(r10 * vbx + r11 * vby + r12 * vbz, axis=0)
    sumz = -jnp.sum(r20 * vbx + r21 * vby + r22 * vbz, axis=0)
    mvx = jnp.where(any_contact, sumx * inv_nc, x_ref[_R_COMW + 0])
    mvy = jnp.where(any_contact, sumy * inv_nc, x_ref[_R_COMW + 1])
    mvz = jnp.where(any_contact, sumz * inv_nc, x_ref[_R_COMW + 2])

    # ---- Kalman predict/update (F = H = I, Q = q*I, R = r*I) ----
    x0 = x_ref[_R_KFM + 0] + dvx
    x1 = x_ref[_R_KFM + 1] + dvy
    x2 = x_ref[_R_KFM + 2] + dvz
    p00 = x_ref[_R_KFC + 0] + q_var; p01 = x_ref[_R_KFC + 1];         p02 = x_ref[_R_KFC + 2]
    p10 = x_ref[_R_KFC + 3];         p11 = x_ref[_R_KFC + 4] + q_var; p12 = x_ref[_R_KFC + 5]
    p20 = x_ref[_R_KFC + 6];         p21 = x_ref[_R_KFC + 7];         p22 = x_ref[_R_KFC + 8] + q_var
    s00 = p00 + r_var; s01 = p01;         s02 = p02
    s10 = p10;         s11 = p11 + r_var; s12 = p12
    s20 = p20;         s21 = p21;         s22 = p22 + r_var
    # 3x3 inverse via cofactors; reciprocal on the EUP + one Newton refinement
    cA = s11 * s22 - s12 * s21
    cB = s12 * s20 - s10 * s22
    cC = s10 * s21 - s11 * s20
    det = s00 * cA + s01 * cB + s02 * cC
    inv0 = pl.reciprocal(det, approx=True)
    inv_det = inv0 * (2.0 - det * inv0)
    i00 = cA * inv_det
    i01 = (s02 * s21 - s01 * s22) * inv_det
    i02 = (s01 * s12 - s02 * s11) * inv_det
    i10 = cB * inv_det
    i11 = (s00 * s22 - s02 * s20) * inv_det
    i12 = (s02 * s10 - s00 * s12) * inv_det
    i20 = cC * inv_det
    i21 = (s01 * s20 - s00 * s21) * inv_det
    i22 = (s00 * s11 - s01 * s10) * inv_det
    # folded gain: t = S^-1 e ;  x+ = x + P t   (== x + K e, K = P S^-1)
    e0 = mvx - x0
    e1 = mvy - x1
    e2 = mvz - x2
    t0 = i00 * e0 + i01 * e1 + i02 * e2
    t1 = i10 * e0 + i11 * e1 + i12 * e2
    t2 = i20 * e0 + i21 * e1 + i22 * e2
    xn0 = x0 + p00 * t0 + p01 * t1 + p02 * t2
    xn1 = x1 + p10 * t0 + p11 * t1 + p12 * t2
    xn2 = x2 + p20 * t0 + p21 * t1 + p22 * t2
    # posterior covariance: P+ = P - P S^-1 P
    m00 = i00 * p00 + i01 * p10 + i02 * p20
    m01 = i00 * p01 + i01 * p11 + i02 * p21
    m02 = i00 * p02 + i01 * p12 + i02 * p22
    m10 = i10 * p00 + i11 * p10 + i12 * p20
    m11 = i10 * p01 + i11 * p11 + i12 * p21
    m12 = i10 * p02 + i11 * p12 + i12 * p22
    m20 = i20 * p00 + i21 * p10 + i22 * p20
    m21 = i20 * p01 + i21 * p11 + i22 * p21
    m22 = i20 * p02 + i21 * p12 + i22 * p22
    o_ref[_O_KFC + 0] = p00 - (p00 * m00 + p01 * m10 + p02 * m20)
    o_ref[_O_KFC + 1] = p01 - (p00 * m01 + p01 * m11 + p02 * m21)
    o_ref[_O_KFC + 2] = p02 - (p00 * m02 + p01 * m12 + p02 * m22)
    o_ref[_O_KFC + 3] = p10 - (p10 * m00 + p11 * m10 + p12 * m20)
    o_ref[_O_KFC + 4] = p11 - (p10 * m01 + p11 * m11 + p12 * m21)
    o_ref[_O_KFC + 5] = p12 - (p10 * m02 + p11 * m12 + p12 * m22)
    o_ref[_O_KFC + 6] = p20 - (p20 * m00 + p21 * m10 + p22 * m20)
    o_ref[_O_KFC + 7] = p21 - (p20 * m01 + p21 * m11 + p22 * m21)
    o_ref[_O_KFC + 8] = p22 - (p20 * m02 + p21 * m12 + p22 * m22)
    o_ref[_O_KFM + 0] = xn0
    o_ref[_O_KFM + 1] = xn1
    o_ref[_O_KFM + 2] = xn2

    # ---- Neumaier moving-window filter (warm-up step: no eviction) ----
    def neumaier(old_sum, old_corr, val):
        new_sum = old_sum + val
        temp = jnp.where(jnp.abs(old_sum) >= jnp.abs(val),
                         old_sum - new_sum + val,
                         val - new_sum + old_sum)
        new_corr = old_corr + temp
        return new_sum, new_corr, (new_sum + new_corr) * inv_win

    ns0, ncr0, v0 = neumaier(x_ref[_R_FSUM + 0], x_ref[_R_FCORR + 0], xn0)
    ns1, ncr1, v1 = neumaier(x_ref[_R_FSUM + 1], x_ref[_R_FCORR + 1], xn1)
    ns2, ncr2, v2 = neumaier(x_ref[_R_FSUM + 2], x_ref[_R_FCORR + 2], xn2)
    o_ref[_O_FSUM + 0] = ns0
    o_ref[_O_FSUM + 1] = ns1
    o_ref[_O_FSUM + 2] = ns2
    o_ref[_O_FCORR + 0] = ncr0
    o_ref[_O_FCORR + 1] = ncr1
    o_ref[_O_FCORR + 2] = ncr2
    o_ref[_O_COMW + 0] = v0          # new com_velocity_world_frame
    o_ref[_O_COMW + 1] = v1
    o_ref[_O_COMW + 2] = v2

    # ---- body-frame velocity = R @ v ----
    o_ref[_O_VBODY + 0] = r00 * v0 + r01 * v1 + r02 * v2
    o_ref[_O_VBODY + 1] = r10 * v0 + r11 * v1 + r12 * v2
    o_ref[_O_VBODY + 2] = r20 * v0 + r21 * v1 + r22 * v2

    # ---- base height estimate ----
    pzf = r20 * fpx + r21 * fpy + r22 * fpz            # z-row of R @ footP^T
    pz_sum = jnp.sum(jnp.where(contact, pzf, zero), axis=0)
    pz = jnp.where(any_contact, pz_sum * inv_nc, 0.0)
    o_ref[_O_H] = one_m_w * stand_h - weight * pz


def velocity_estimator_forward(obs, sensor_acc, rpy, foot_contact, foot_vel, foot_pos,
                               com_vel_world, kf_mean, kf_cov_flat, filt_sum, filt_corr,
                               *, delta_time, stand_up_height, window_size,
                               accelerometer_variance=0.1, sensor_variance=0.1):
    n = obs.shape[0]
    f32 = jnp.float32
    rows = lambda a: jnp.transpose(a.astype(f32))       # (N, k) -> (k, N)

    # Pack every per-env field into one (58, N) slab (single DMA stream).
    # NOTE: a production integration should keep the module-owned state tensors
    # stored in this packed lane-major layout so this per-call pack disappears.
    packed = jnp.concatenate([
        rows(obs[:, 6:9]),                                               # angular rate
        rows(sensor_acc),
        rows(rpy),
        rows(com_vel_world),
        rows(kf_mean),
        rows(filt_sum),
        rows(filt_corr),
        rows(foot_contact.astype(f32)),
        rows(kf_cov_flat),
        jnp.transpose(foot_vel.astype(f32), (2, 1, 0)).reshape(12, n),   # comp-major
        jnp.transpose(foot_pos.astype(f32), (2, 1, 0)).reshape(12, n),
    ], axis=0)

    # Pad batch to a multiple of 8*128 so every per-env field folds into dense
    # (sublane, lane) vreg tiles (padded envs are zero; all math stays finite).
    n_pad = ((n + 1023) // 1024) * 1024
    if n_pad != n:
        packed = jnp.pad(packed, ((0, 0), (0, n_pad - n)))
    n_sub = n_pad // 128                               # multiple of 8
    packed = packed.reshape(_IN_ROWS, n_sub, 128)

    scal = jnp.array([delta_time, stand_up_height, 1.0 / window_size,
                      accelerometer_variance, sensor_variance, 0.0, 0.0, 0.0], dtype=f32)

    # Batch tile: up to 8192 envs (64 sublanes) per grid step; keep >= 2 grid
    # steps when there is enough work so v7x's two TensorCores both run.
    bn_sub = None
    for cand in (64, 56, 48, 40, 32, 24, 16, 8):
        if n_sub % cand == 0 and n_sub // cand >= 2:
            bn_sub = cand
            break
    if bn_sub is None:
        bn_sub = min(n_sub, 64)
        while n_sub % bn_sub:
            bn_sub -= 8
    grid = (n_sub // bn_sub,)

    out = pl.pallas_call(
        _vel_est_kernel,
        out_shape=jax.ShapeDtypeStruct((_OUT_ROWS, n_sub, 128), f32),
        grid=grid,
        in_specs=[
            pl.BlockSpec(memory_space=pltpu.MemorySpace.SMEM),          # scalars
            pl.BlockSpec((_IN_ROWS, bn_sub, 128), lambda i: (0, i, 0)),  # packed slab
        ],
        out_specs=pl.BlockSpec((_OUT_ROWS, bn_sub, 128), lambda i: (0, i, 0)),
        compiler_params=pltpu.CompilerParams(
            dimension_semantics=("parallel",)),
    )(scal, packed)

    out = out.reshape(_OUT_ROWS, n_pad)[:, :n]
    v_body = jnp.transpose(out[_O_VBODY:_O_VBODY + 3])     # (N, 3)
    h = jnp.transpose(out[_O_H:_O_H + 1])                  # (N, 1)
    new_state = {
        "kf_mean": jnp.transpose(out[_O_KFM:_O_KFM + 3]),
        "kf_cov_flat": jnp.transpose(out[_O_KFC:_O_KFC + 9]),
        "filt_sum": jnp.transpose(out[_O_FSUM:_O_FSUM + 3]),
        "filt_corr": jnp.transpose(out[_O_FCORR:_O_FCORR + 3]),
        "com_vel_world": jnp.transpose(out[_O_COMW:_O_COMW + 3]),
    }
    return v_body, h, new_state


def _reference(obs, sensor_acc, rpy, foot_contact, foot_vel, foot_pos,
               com_vel_world, kf_mean, kf_cov_flat, filt_sum, filt_corr,
               *, delta_time, stand_up_height, window_size,
               accelerometer_variance=0.1, sensor_variance=0.1):
    """Pure-JAX mirror of the torch module's _update() for correctness check."""
    n = obs.shape[0]
    rate = obs[:, 6:9]
    roll, pitch, yaw = rpy[:, 0], rpy[:, 1], rpy[:, 2]
    cr, sr = jnp.cos(roll), jnp.sin(roll)
    cp, sp = jnp.cos(pitch), jnp.sin(pitch)
    cy, sy = jnp.cos(yaw), jnp.sin(yaw)
    R = jnp.stack([
        jnp.stack([cy * cp, cy * sp * sr - sy * cr, cy * sp * cr + sy * sr], -1),
        jnp.stack([sy * cp, sy * sp * sr + cy * cr, sy * sp * cr - cy * sr], -1),
        jnp.stack([-sp, cp * sr, cp * cr], -1)], axis=1)                 # (N,3,3)
    cacc = jnp.einsum('nij,nj->ni', R, sensor_acc).at[:, 2].add(-9.81)
    deltaV = cacc * delta_time
    contact = foot_contact > 0.5
    numc = jnp.sum(contact.astype(jnp.float32), axis=1, keepdims=True)
    any_c = numc > 0.5
    wx, wy, wz = rate[:, 0:1], rate[:, 1:2], rate[:, 2:3]
    fpx, fpy, fpz = foot_pos[:, :, 0], foot_pos[:, :, 1], foot_pos[:, :, 2]
    fvx, fvy, fvz = foot_vel[:, :, 0], foot_vel[:, :, 1], foot_vel[:, :, 2]
    vB = jnp.stack([jnp.where(contact, fvx + wy * fpz - wz * fpy, 0.0),
                    jnp.where(contact, fvy + wz * fpx - wx * fpz, 0.0),
                    jnp.where(contact, fvz + wx * fpy - wy * fpx, 0.0)], axis=1)
    RvB = jnp.einsum('nij,njk->nik', R, vB)
    denom = jnp.where(any_c, numc, 1.0)
    obs_v = jnp.where(any_c, jnp.sum(-RvB, axis=2) / denom, com_vel_world)
    weight = any_c.astype(jnp.float32)
    mean_v = com_vel_world * (1 - weight) + weight * obs_v
    eye = jnp.eye(3, dtype=jnp.float32)
    x = kf_mean + deltaV
    P = kf_cov_flat.reshape(n, 3, 3) + accelerometer_variance * eye
    S = P + sensor_variance * eye
    Sinv = jnp.linalg.inv(S)
    xn = x + jnp.einsum('nij,nj->ni', P @ Sinv, mean_v - x)
    new_sum = filt_sum + xn
    temp = jnp.where(jnp.abs(filt_sum) >= jnp.abs(xn),
                     filt_sum - new_sum + xn, xn - new_sum + filt_sum)
    v = (new_sum + (filt_corr + temp)) / window_size
    v_body = jnp.einsum('nij,nj->ni', R, v)
    Pz_rows = jnp.einsum('nj,nkj->nk', R[:, 2, :], foot_pos)
    Pz = jnp.where(any_c, jnp.sum(jnp.where(contact, Pz_rows, 0.0),
                                  axis=1, keepdims=True) / denom, 0.0)
    h = -weight * Pz + (1 - weight) * stand_up_height
    return v_body, h, xn


if __name__ == "__main__":
    key = jax.random.PRNGKey(0)
    n = 8                                  # num_envs (obs docstring uses 1; batched here)
    ks = jax.random.split(key, 6)
    obs = jax.random.normal(ks[0], (n, 320), dtype=jnp.float32) * 0.1
    sensor_acc = jax.random.normal(ks[1], (n, 3), dtype=jnp.float32)
    sensor_acc = sensor_acc.at[:, 2].add(9.81)
    rpy = jax.random.normal(ks[2], (n, 3), dtype=jnp.float32) * 0.1
    foot_contact = (jax.random.uniform(ks[3], (n, 4)) > 0.3).astype(jnp.float32)
    foot_vel = jax.random.normal(ks[4], (n, 4, 3), dtype=jnp.float32) * 0.2
    foot_pos = jax.random.normal(ks[5], (n, 4, 3), dtype=jnp.float32) * 0.1
    foot_pos = foot_pos.at[:, :, 2].add(-0.3)

    # module state, as initialized in VelocityEstimator.__init__
    com_vel_world = jnp.zeros((n, 3), jnp.float32)
    kf_mean = jnp.zeros((n, 3), jnp.float32)
    kf_cov_flat = jnp.tile(0.1 * jnp.eye(3, dtype=jnp.float32).reshape(1, 9), (n, 1))
    filt_sum = jnp.zeros((n, 3), jnp.float32)
    filt_corr = jnp.zeros((n, 3), jnp.float32)

    kwargs = dict(delta_time=0.01, stand_up_height=0.3, window_size=120,
                  accelerometer_variance=0.1, sensor_variance=0.1)
    v_body, h, state = velocity_estimator_forward(
        obs, sensor_acc, rpy, foot_contact, foot_vel, foot_pos,
        com_vel_world, kf_mean, kf_cov_flat, filt_sum, filt_corr, **kwargs)
    jax.block_until_ready((v_body, h, state))

    v_ref, h_ref, xn_ref = _reference(
        obs, sensor_acc, rpy, foot_contact, foot_vel, foot_pos,
        com_vel_world, kf_mean, kf_cov_flat, filt_sum, filt_corr, **kwargs)

    assert v_body.shape == (n, 3) and h.shape == (n, 1)
    assert bool(jnp.all(jnp.isfinite(v_body))) and bool(jnp.all(jnp.isfinite(h)))
    assert bool(jnp.allclose(v_body, v_ref, atol=2e-3, rtol=2e-3)), \
        float(jnp.max(jnp.abs(v_body - v_ref)))
    assert bool(jnp.allclose(h, h_ref, atol=2e-3, rtol=2e-3)), \
        float(jnp.max(jnp.abs(h - h_ref)))
    assert bool(jnp.allclose(state["kf_mean"], xn_ref, atol=2e-3, rtol=2e-3))
    print("KERNEL_OK")
</pallas_src>

<mosaic_0001>
module attributes {stable_mosaic.version = 11 : i64} {
  func.func @_vel_est_kernel(%arg0: i32, %arg1: memref<8xf32, #tpu.memory_space<smem>>, %arg2: memref<58x8x128xf32, #tpu.memory_space<vmem>>, %arg3: memref<25x8x128xf32, #tpu.memory_space<vmem>>) attributes {dimension_semantics = [#tpu.dimension_semantics<parallel>], iteration_bounds = array<i64: 1>, scalar_prefetch = 0 : i64, scratch_operands = 0 : i64, tpu.core_type = #tpu.core_type<tc>, window_params = [{transform_indices = @transform_0, window_bounds = array<i64: 8>}, {transform_indices = @transform_1, window_bounds = array<i64: 58, 8, 128>}, {transform_indices = @transform_2, window_bounds = array<i64: 25, 8, 128>}]} {
    %c0 = arith.constant 0 : index
    %0 = memref.load %arg1[%c0] : memref<8xf32, #tpu.memory_space<smem>>
    %c1 = arith.constant 1 : index
    %1 = memref.load %arg1[%c1] : memref<8xf32, #tpu.memory_space<smem>>
    %c2 = arith.constant 2 : index
    %2 = memref.load %arg1[%c2] : memref<8xf32, #tpu.memory_space<smem>>
    %c3 = arith.constant 3 : index
    %3 = memref.load %arg1[%c3] : memref<8xf32, #tpu.memory_space<smem>>
    %c4 = arith.constant 4 : index
    %4 = memref.load %arg1[%c4] : memref<8xf32, #tpu.memory_space<smem>>
    %c6 = arith.constant 6 : index
    %c0_0 = arith.constant 0 : index
    %c0_1 = arith.constant 0 : index
    %5 = vector.load %arg2[%c6, %c0_0, %c0_1] : memref<58x8x128xf32, #tpu.memory_space<vmem>>, vector<1x8x128xf32>
    %6 = vector.shape_cast %5 : vector<1x8x128xf32> to vector<8x128xf32>
    %c7 = arith.constant 7 : index
    %c0_2 = arith.constant 0 : index
    %c0_3 = arith.constant 0 : index
    %7 = vector.load %arg2[%c7, %c0_2, %c0_3] : memref<58x8x128xf32, #tpu.memory_space<vmem>>, vector<1x8x128xf32>
    %8 = vector.shape_cast %7 : vector<1x8x128xf32> to vector<8x128xf32>
    %c8 = arith.constant 8 : index
    %c0_4 = arith.constant 0 : index
    %c0_5 = arith.constant 0 : index
    %9 = vector.load %arg2[%c8, %c0_4, %c0_5] : memref<58x8x128xf32, #tpu.memory_space<vmem>>, vector<1x8x128xf32>
    %10 = vector.shape_cast %9 : vector<1x8x128xf32> to vector<8x128xf32>
    %11 = math.cos %6 : vector<8x128xf32>
    %12 = math.sin %6 : vector<8x128xf32>
    %13 = math.cos %8 : vector<8x128xf32>
    %14 = math.sin %8 : vector<8x128xf32>
    %15 = math.cos %10 : vector<8x128xf32>
    %16 = math.sin %10 : vector<8x128xf32>
    %17 = arith.mulf %15, %13 : vector<8x128xf32>
    %18 = arith.mulf %15, %14 : vector<8x128xf32>
    %19 = arith.mulf %18, %12 : vector<8x128xf32>
    %20 = arith.mulf %16, %11 : vector<8x128xf32>
    %21 = arith.subf %19, %20 : vector<8x128xf32>
    %22 = arith.mulf %15, %14 : vector<8x128xf32>
    %23 = arith.mulf %22, %11 : vector<8x128xf32>
    %24 = arith.mulf %16, %12 : vector<8x128xf32>
    %25 = arith.addf %23, %24 : vector<8x128xf32>
    %26 = arith.mulf %16, %13 : vector<8x128xf32>
    %27 = arith.mulf %16, %14 : vector<8x128xf32>
    %28 = arith.mulf %27, %12 : vector<8x128xf32>
    %29 = arith.mulf %15, %11 : vector<8x128xf32>
    %30 = arith.addf %28, %29 : vector<8x128xf32>
    %31 = arith.mulf %16, %14 : vector<8x128xf32>
    %32 = arith.mulf %31, %11 : vector<8x128xf32>
    %33 = arith.mulf %15, %12 : vector<8x128xf32>
    %34 = arith.subf %32, %33 : vector<8x128xf32>
    %cst = arith.constant 0.000000e+00 : f32
    %35 = vector.broadcast %cst : f32 to vector<8x128xf32>
    %36 = arith.subf %35, %14 : vector<8x128xf32>
    %37 = arith.mulf %13, %12 : vector<8x128xf32>
    %38 = arith.mulf %13, %11 : vector<8x128xf32>
    %c3_6 = arith.constant 3 : index
    %c0_7 = arith.constant 0 : index
    %c0_8 = arith.constant 0 : index
    %39 = vector.load %arg2[%c3_6, %c0_7, %c0_8] : memref<58x8x128xf32, #tpu.memory_space<vmem>>, vector<1x8x128xf32>
    %40 = vector.shape_cast %39 : vector<1x8x128xf32> to vector<8x128xf32>
    %c4_9 = arith.constant 4 : index
    %c0_10 = arith.constant 0 : index
    %c0_11 = arith.constant 0 : index
    %41 = vector.load %arg2[%c4_9, %c0_10, %c0_11] : memref<58x8x128xf32, #tpu.memory_space<vmem>>, vector<1x8x128xf32>
    %42 = vector.shape_cast %41 : vector<1x8x128xf32> to vector<8x128xf32>
    %c5 = arith.constant 5 : index
    %c0_12 = arith.constant 0 : index
    %c0_13 = arith.constant 0 : index
    %43 = vector.load %arg2[%c5, %c0_12, %c0_13] : memref<58x8x128xf32, #tpu.memory_space<vmem>>, vector<1x8x128xf32>
    %44 = vector.shape_cast %43 : vector<1x8x128xf32> to vector<8x128xf32>
    %45 = arith.mulf %17, %40 : vector<8x128xf32>
    %46 = arith.mulf %21, %42 : vector<8x128xf32>
    %47 = arith.addf %45, %46 : vector<8x128xf32>
    %48 = arith.mulf %25, %44 : vector<8x128xf32>
    %49 = arith.addf %47, %48 : vector<8x128xf32>
    %50 = vector.broadcast %0 : f32 to vector<8x128xf32>
    %51 = arith.mulf %49, %50 : vector<8x128xf32>
    %52 = arith.mulf %26, %40 : vector<8x128xf32>
    %53 = arith.mulf %30, %42 : vector<8x128xf32>
    %54 = arith.addf %52, %53 : vector<8x128xf32>
    %55 = arith.mulf %34, %44 : vector<8x128xf32>
    %56 = arith.addf %54, %55 : vector<8x128xf32>
    %57 = vector.broadcast %0 : f32 to vector<8x128xf32>
    %58 = arith.mulf %56, %57 : vector<8x128xf32>
    %59 = arith.mulf %36, %40 : vector<8x128xf32>
    %60 = arith.mulf %37, %42 : vector<8x128xf32>
    %61 = arith.addf %59, %60 : vector<8x128xf32>
    %62 = arith.mulf %38, %44 : vector<8x128xf32>
    %63 = arith.addf %61, %62 : vector<8x128xf32>
    %cst_14 = arith.constant 9.810000e+00 : f32
    %64 = vector.broadcast %cst_14 : f32 to vector<8x128xf32>
    %65 = arith.subf %63, %64 : vector<8x128xf32>
    %66 = vector.broadcast %0 : f32 to vector<8x128xf32>
    %67 = arith.mulf %65, %66 : vector<8x128xf32>
    %c21 = arith.constant 21 : index
    %c0_15 = arith.constant 0 : index
    %c0_16 = arith.constant 0 : index
    %68 = vector.load %arg2[%c21, %c0_15, %c0_16] : memref<58x8x128xf32, #tpu.memory_space<vmem>>, vector<4x8x128xf32>
    %cst_17 = arith.constant 5.000000e-01 : f32
    %69 = vector.broadcast %cst_17 : f32 to vector<4x8x128xf32>
    %70 = arith.cmpf ogt, %68, %69 : vector<4x8x128xf32>
    %cst_18 = arith.constant dense<0.000000e+00> : vector<8x128xf32>
    %71 = vector.multi_reduction <add>, %68, %cst_18 [0] : vector<4x8x128xf32> to vector<8x128xf32>
    %cst_19 = arith.constant 5.000000e-01 : f32
    %72 = vector.broadcast %cst_19 : f32 to vector<8x128xf32>
    %73 = arith.cmpf ogt, %71, %72 : vector<8x128xf32>
    %74 = arith.extui %73 : vector<8x128xi1> to vector<8x128xi32>
    %75 = arith.sitofp %74 : vector<8x128xi32> to vector<8x128xf32>
    %cst_20 = arith.constant 1.000000e+00 : f32
    %76 = vector.broadcast %cst_20 : f32 to vector<8x128xf32>
    %77 = arith.subf %76, %75 : vector<8x128xf32>
    %cst_21 = arith.constant 3.500000e+00 : f32
    %78 = vector.broadcast %cst_21 : f32 to vector<8x128xf32>
    %79 = arith.cmpf ogt, %71, %78 : vector<8x128xf32>
    %cst_22 = arith.constant 2.500000e+00 : f32
    %80 = vector.broadcast %cst_22 : f32 to vector<8x128xf32>
    %81 = arith.cmpf ogt, %71, %80 : vector<8x128xf32>
    %cst_23 = arith.constant 1.500000e+00 : f32
    %82 = vector.broadcast %cst_23 : f32 to vector<8x128xf32>
    %83 = arith.cmpf ogt, %71, %82 : vector<8x128xf32>
    %cst_24 = arith.constant 5.000000e-01 : f32
    %cst_25 = arith.constant 1.000000e+00 : f32
    %84 = vector.broadcast %cst_24 : f32 to vector<8x128xf32>
    %85 = vector.broadcast %cst_25 : f32 to vector<8x128xf32>
    %86 = arith.select %83, %84, %85 : vector<8x128xi1>, vector<8x128xf32>
    %cst_26 = arith.constant 0.333333343 : f32
    %87 = vector.broadcast %cst_26 : f32 to vector<8x128xf32>
    %88 = arith.select %81, %87, %86 : vector<8x128xi1>, vector<8x128xf32>
    %cst_27 = arith.constant 2.500000e-01 : f32
    %89 = vector.broadcast %cst_27 : f32 to vector<8x128xf32>
    %90 = arith.select %79, %89, %88 : vector<8x128xi1>, vector<8x128xf32>
    %c0_28 = arith.constant 0 : index
    %c0_29 = arith.constant 0 : index
    %c0_30 = arith.constant 0 : index
    %91 = vector.load %arg2[%c0_28, %c0_29, %c0_30] : memref<58x8x128xf32, #tpu.memory_space<vmem>>, vector<1x8x128xf32>
    %92 = vector.shape_cast %91 : vector<1x8x128xf32> to vector<8x128xf32>
    %c1_31 = arith.constant 1 : index
    %c0_32 = arith.constant 0 : index
    %c0_33 = arith.constant 0 : index
    %93 = vector.load %arg2[%c1_31, %c0_32, %c0_33] : memref<58x8x128xf32, #tpu.memory_space<vmem>>, vector<1x8x128xf32>
    %94 = vector.shape_cast %93 : vector<1x8x128xf32> to vector<8x128xf32>
    %c2_34 = arith.constant 2 : index
    %c0_35 = arith.constant 0 : index
    %c0_36 = arith.constant 0 : index
    %95 = vector.load %arg2[%c2_34, %c0_35, %c0_36] : memref<58x8x128xf32, #tpu.memory_space<vmem>>, vector<1x8x128xf32>
    %96 = vector.shape_cast %95 : vector<1x8x128xf32> to vector<8x128xf32>
    %c34 = arith.constant 34 : index
    %c0_37 = arith.constant 0 : index
    %c0_38 = arith.constant 0 : index
    %97 = vector.load %arg2[%c34, %c0_37, %c0_38] : memref<58x8x128xf32, #tpu.memory_space<vmem>>, vector<4x8x128xf32>
    %c38 = arith.constant 38 : index
    %c0_39 = arith.constant 0 : index
    %c0_40 = arith.constant 0 : index
    %98 = vector.load %arg2[%c38, %c0_39, %c0_40] : memref<58x8x128xf32, #tpu.memory_space<vmem>>, vector<4x8x128xf32>
    %c42 = arith.constant 42 : index
    %c0_41 = arith.constant 0 : index
    %c0_42 = arith.constant 0 : index
    %99 = vector.load %arg2[%c42, %c0_41, %c0_42] : memref<58x8x128xf32, #tpu.memory_space<vmem>>, vector<4x8x128xf32>
    %c46 = arith.constant 46 : index
    %c0_43 = arith.constant 0 : index
    %c0_44 = arith.constant 0 : index
    %100 = vector.load %arg2[%c46, %c0_43, %c0_44] : memref<58x8x128xf32, #tpu.memory_space<vmem>>, vector<4x8x128xf32>
    %c50 = arith.constant 50 : index
    %c0_45 = arith.constant 0 : index
    %c0_46 = arith.constant 0 : index
    %101 = vector.load %arg2[%c50, %c0_45, %c0_46] : memref<58x8x128xf32, #tpu.memory_space<vmem>>, vector<4x8x128xf32>
    %c54 = arith.constant 54 : index
    %c0_47 = arith.constant 0 : index
    %c0_48 = arith.constant 0 : index
    %102 = vector.load %arg2[%c54, %c0_47, %c0_48] : memref<58x8x128xf32, #tpu.memory_space<vmem>>, vector<4x8x128xf32>
    %cst_49 = arith.constant 0.000000e+00 : f32
    %103 = vector.broadcast %cst_49 : f32 to vector<4x8x128xf32>
    %104 = vector.shape_cast %94 : vector<8x128xf32> to vector<1x8x128xf32>
    %105 = vector.broadcast %104 : vector<1x8x128xf32> to vector<4x8x128xf32>
    %106 = arith.mulf %105, %102 : vector<4x8x128xf32>
    %107 = vector.shape_cast %96 : vector<8x128xf32> to vector<1x8x128xf32>
    %108 = vector.broadcast %107 : vector<1x8x128xf32> to vector<4x8x128xf32>
    %109 = arith.mulf %108, %101 : vector<4x8x128xf32>
    %110 = arith.subf %106, %109 : vector<4x8x128xf32>
    %111 = arith.addf %97, %110 : vector<4x8x128xf32>
    %112 = arith.select %70, %111, %103 : vector<4x8x128xi1>, vector<4x8x128xf32>
    %113 = vector.shape_cast %96 : vector<8x128xf32> to vector<1x8x128xf32>
    %114 = vector.broadcast %113 : vector<1x8x128xf32> to vector<4x8x128xf32>
    %115 = arith.mulf %114, %100 : vector<4x8x128xf32>
    %116 = vector.shape_cast %92 : vector<8x128xf32> to vector<1x8x128xf32>
    %117 = vector.broadcast %116 : vector<1x8x128xf32> to vector<4x8x128xf32>
    %118 = arith.mulf %117, %102 : vector<4x8x128xf32>
    %119 = arith.subf %115, %118 : vector<4x8x128xf32>
    %120 = arith.addf %98, %119 : vector<4x8x128xf32>
    %121 = arith.select %70, %120, %103 : vector<4x8x128xi1>, vector<4x8x128xf32>
    %122 = vector.shape_cast %92 : vector<8x128xf32> to vector<1x8x128xf32>
    %123 = vector.broadcast %122 : vector<1x8x128xf32> to vector<4x8x128xf32>
    %124 = arith.mulf %123, %101 : vector<4x8x128xf32>
    %125 = vector.shape_cast %94 : vector<8x128xf32> to vector<1x8x128xf32>
    %126 = vector.broadcast %125 : vector<1x8x128xf32> to vector<4x8x128xf32>
    %127 = arith.mulf %126, %100 : vector<4x8x128xf32>
    %128 = arith.subf %124, %127 : vector<4x8x128xf32>
    %129 = arith.addf %99, %128 : vector<4x8x128xf32>
    %130 = arith.select %70, %129, %103 : vector<4x8x128xi1>, vector<4x8x128xf32>
    %131 = vector.shape_cast %17 : vector<8x128xf32> to vector<1x8x128xf32>
    %132 = vector.broadcast %131 : vector<1x8x128xf32> to vector<4x8x128xf32>
    %133 = arith.mulf %132, %112 : vector<4x8x128xf32>
    %134 = vector.shape_cast %21 : vector<8x128xf32> to vector<1x8x128xf32>
    %135 = vector.broadcast %134 : vector<1x8x128xf32> to vector<4x8x128xf32>
    %136 = arith.mulf %135, %121 : vector<4x8x128xf32>
    %137 = arith.addf %133, %136 : vector<4x8x128xf32>
    %138 = vector.shape_cast %25 : vector<8x128xf32> to vector<1x8x128xf32>
    %139 = vector.broadcast %138 : vector<1x8x128xf32> to vector<4x8x128xf32>
    %140 = arith.mulf %139, %130 : vector<4x8x128xf32>
    %141 = arith.addf %137, %140 : vector<4x8x128xf32>
    %cst_50 = arith.constant dense<0.000000e+00> : vector<8x128xf32>
    %142 = vector.multi_reduction <add>, %141, %cst_50 [0] : vector<4x8x128xf32> to vector<8x128xf32>
    %cst_51 = arith.constant 0.000000e+00 : f32
    %143 = vector.broadcast %cst_51 : f32 to vector<8x128xf32>
    %144 = arith.subf %143, %142 : vector<8x128xf32>
    %145 = vector.shape_cast %26 : vector<8x128xf32> to vector<1x8x128xf32>
    %146 = vector.broadcast %145 : vector<1x8x128xf32> to vector<4x8x128xf32>
    %147 = arith.mulf %146, %112 : vector<4x8x128xf32>
    %148 = vector.shape_cast %30 : vector<8x128xf32> to vector<1x8x128xf32>
    %149 = vector.broadcast %148 : vector<1x8x128xf32> to vector<4x8x128xf32>
    %150 = arith.mulf %149, %121 : vector<4x8x128xf32>
    %151 = arith.addf %147, %150 : vector<4x8x128xf32>
    %152 = vector.shape_cast %34 : vector<8x128xf32> to vector<1x8x128xf32>
    %153 = vector.broadcast %152 : vector<1x8x128xf32> to vector<4x8x128xf32>
    %154 = arith.mulf %153, %130 : vector<4x8x128xf32>
    %155 = arith.addf %151, %154 : vector<4x8x128xf32>
    %cst_52 = arith.constant dense<0.000000e+00> : vector<8x128xf32>
    %156 = vector.multi_reduction <add>, %155, %cst_52 [0] : vector<4x8x128xf32> to vector<8x128xf32>
    %cst_53 = arith.constant 0.000000e+00 : f32
    %157 = vector.broadcast %cst_53 : f32 to vector<8x128xf32>
    %158 = arith.subf %157, %156 : vector<8x128xf32>
    %159 = vector.shape_cast %36 : vector<8x128xf32> to vector<1x8x128xf32>
    %160 = vector.broadcast %159 : vector<1x8x128xf32> to vector<4x8x128xf32>
    %161 = arith.mulf %160, %112 : vector<4x8x128xf32>
    %162 = vector.shape_cast %37 : vector<8x128xf32> to vector<1x8x128xf32>
    %163 = vector.broadcast %162 : vector<1x8x128xf32> to vector<4x8x128xf32>
    %164 = arith.mulf %163, %121 : vector<4x8x128xf32>
    %165 = arith.addf %161, %164 : vector<4x8x128xf32>
    %166 = vector.shape_cast %38 : vector<8x128xf32> to vector<1x8x128xf32>
    %167 = vector.broadcast %166 : vector<1x8x128xf32> to vector<4x8x128xf32>
    %168 = arith.mulf %167, %130 : vector<4x8x128xf32>
    %169 = arith.addf %165, %168 : vector<4x8x128xf32>
    %cst_54 = arith.constant dense<0.000000e+00> : vector<8x128xf32>
    %170 = vector.multi_reduction <add>, %169, %cst_54 [0] : vector<4x8x128xf32> to vector<8x128xf32>
    %cst_55 = arith.constant 0.000000e+00 : f32
    %171 = vector.broadcast %cst_55 : f32 to vector<8x128xf32>
    %172 = arith.subf %171, %170 : vector<8x128xf32>
    %173 = arith.mulf %144, %90 : vector<8x128xf32>
    %c9 = arith.constant 9 : index
    %c0_56 = arith.constant 0 : index
    %c0_57 = arith.constant 0 : index
    %174 = vector.load %arg2[%c9, %c0_56, %c0_57] : memref<58x8x128xf32, #tpu.memory_space<vmem>>, vector<1x8x128xf32>
    %175 = vector.shape_cast %174 : vector<1x8x128xf32> to vector<8x128xf32>
    %176 = arith.select %73, %173, %175 : vector<8x128xi1>, vector<8x128xf32>
    %177 = arith.mulf %158, %90 : vector<8x128xf32>
    %c10 = arith.constant 10 : index
    %c0_58 = arith.constant 0 : index
    %c0_59 = arith.constant 0 : index
    %178 = vector.load %arg2[%c10, %c0_58, %c0_59] : memref<58x8x128xf32, #tpu.memory_space<vmem>>, vector<1x8x128xf32>
    %179 = vector.shape_cast %178 : vector<1x8x128xf32> to vector<8x128xf32>
    %180 = arith.select %73, %177, %179 : vector<8x128xi1>, vector<8x128xf32>
    %181 = arith.mulf %172, %90 : vector<8x128xf32>
    %c11 = arith.constant 11 : index
    %c0_60 = arith.constant 0 : index
    %c0_61 = arith.constant 0 : index
    %182 = vector.load %arg2[%c11, %c0_60, %c0_61] : memref<58x8x128xf32, #tpu.memory_space<vmem>>, vector<1x8x128xf32>
    %183 = vector.shape_cast %182 : vector<1x8x128xf32> to vector<8x128xf32>
    %184 = arith.select %73, %181, %183 : vector<8x128xi1>, vector<8x128xf32>
    %c12 = arith.constant 12 : index
    %c0_62 = arith.constant 0 : index
    %c0_63 = arith.constant 0 : index
    %185 = vector.load %arg2[%c12, %c0_62, %c0_63] : memref<58x8x128xf32, #tpu.memory_space<vmem>>, vector<1x8x128xf32>
    %186 = vector.shape_cast %185 : vector<1x8x128xf32> to vector<8x128xf32>
    %187 = arith.addf %186, %51 : vector<8x128xf32>
    %c13 = arith.constant 13 : index
    %c0_64 = arith.constant 0 : index
    %c0_65 = arith.constant 0 : index
    %188 = vector.load %arg2[%c13, %c0_64, %c0_65] : memref<58x8x128xf32, #tpu.memory_space<vmem>>, vector<1x8x128xf32>
    %189 = vector.shape_cast %188 : vector<1x8x128xf32> to vector<8x128xf32>
    %190 = arith.addf %189, %58 : vector<8x128xf32>
    %c14 = arith.constant 14 : index
    %c0_66 = arith.constant 0 : index
    %c0_67 = arith.constant 0 : index
    %191 = vector.load %arg2[%c14, %c0_66, %c0_67] : memref<58x8x128xf32, #tpu.memory_space<vmem>>, vector<1x8x128xf32>
    %192 = vector.shape_cast %191 : vector<1x8x128xf32> to vector<8x128xf32>
    %193 = arith.addf %192, %67 : vector<8x128xf32>
    %c25 = arith.constant 25 : index
    %c0_68 = arith.constant 0 : index
    %c0_69 = arith.constant 0 : index
    %194 = vector.load %arg2[%c25, %c0_68, %c0_69] : memref<58x8x128xf32, #tpu.memory_space<vmem>>, vector<1x8x128xf32>
    %195 = vector.shape_cast %194 : vector<1x8x128xf32> to vector<8x128xf32>
    %196 = vector.broadcast %3 : f32 to vector<8x128xf32>
    %197 = arith.addf %195, %196 : vector<8x128xf32>
    %c26 = arith.constant 26 : index
    %c0_70 = arith.constant 0 : index
    %c0_71 = arith.constant 0 : index
    %198 = vector.load %arg2[%c26, %c0_70, %c0_71] : memref<58x8x128xf32, #tpu.memory_space<vmem>>, vector<1x8x128xf32>
    %199 = vector.shape_cast %198 : vector<1x8x128xf32> to vector<8x128xf32>
    %c27 = arith.constant 27 : index
    %c0_72 = arith.constant 0 : index
    %c0_73 = arith.constant 0 : index
    %200 = vector.load %arg2[%c27, %c0_72, %c0_73] : memref<58x8x128xf32, #tpu.memory_space<vmem>>, vector<1x8x128xf32>
    %201 = vector.shape_cast %200 : vector<1x8x128xf32> to vector<8x128xf32>
    %c28 = arith.constant 28 : index
    %c0_74 = arith.constant 0 : index
    %c0_75 = arith.constant 0 : index
    %202 = vector.load %arg2[%c28, %c0_74, %c0_75] : memref<58x8x128xf32, #tpu.memory_space<vmem>>, vector<1x8x128xf32>
    %203 = vector.shape_cast %202 : vector<1x8x128xf32> to vector<8x128xf32>
    %c29 = arith.constant 29 : index
    %c0_76 = arith.constant 0 : index
    %c0_77 = arith.constant 0 : index
    %204 = vector.load %arg2[%c29, %c0_76, %c0_77] : memref<58x8x128xf32, #tpu.memory_space<vmem>>, vector<1x8x128xf32>
    %205 = vector.shape_cast %204 : vector<1x8x128xf32> to vector<8x128xf32>
    %206 = vector.broadcast %3 : f32 to vector<8x128xf32>
    %207 = arith.addf %205, %206 : vector<8x128xf32>
    %c30 = arith.constant 30 : index
    %c0_78 = arith.constant 0 : index
    %c0_79 = arith.constant 0 : index
    %208 = vector.load %arg2[%c30, %c0_78, %c0_79] : memref<58x8x128xf32, #tpu.memory_space<vmem>>, vector<1x8x128xf32>
    %209 = vector.shape_cast %208 : vector<1x8x128xf32> to vector<8x128xf32>
    %c31 = arith.constant 31 : index
    %c0_80 = arith.constant 0 : index
    %c0_81 = arith.constant 0 : index
    %210 = vector.load %arg2[%c31, %c0_80, %c0_81] : memref<58x8x128xf32, #tpu.memory_space<vmem>>, vector<1x8x128xf32>
    %211 = vector.shape_cast %210 : vector<1x8x128xf32> to vector<8x128xf32>
    %c32 = arith.constant 32 : index
    %c0_82 = arith.constant 0 : index
    %c0_83 = arith.constant 0 : index
    %212 = vector.load %arg2[%c32, %c0_82, %c0_83] : memref<58x8x128xf32, #tpu.memory_space<vmem>>, vector<1x8x128xf32>
    %213 = vector.shape_cast %212 : vector<1x8x128xf32> to vector<8x128xf32>
    %c33 = arith.constant 33 : index
    %c0_84 = arith.constant 0 : index
    %c0_85 = arith.constant 0 : index
    %214 = vector.load %arg2[%c33, %c0_84, %c0_85] : memref<58x8x128xf32, #tpu.memory_space<vmem>>, vector<1x8x128xf32>
    %215 = vector.shape_cast %214 : vector<1x8x128xf32> to vector<8x128xf32>
    %216 = vector.broadcast %3 : f32 to vector<8x128xf32>
    %217 = arith.addf %215, %216 : vector<8x128xf32>
    %218 = vector.broadcast %4 : f32 to vector<8x128xf32>
    %219 = arith.addf %197, %218 : vector<8x128xf32>
    %220 = vector.broadcast %4 : f32 to vector<8x128xf32>
    %221 = arith.addf %207, %220 : vector<8x128xf32>
    %222 = vector.broadcast %4 : f32 to vector<8x128xf32>
    %223 = arith.addf %217, %222 : vector<8x128xf32>
    %224 = arith.mulf %221, %223 : vector<8x128xf32>
    %225 = arith.mulf %209, %213 : vector<8x128xf32>
    %226 = arith.subf %224, %225 : vector<8x128xf32>
    %227 = arith.mulf %209, %211 : vector<8x128xf32>
    %228 = arith.mulf %203, %223 : vector<8x128xf32>
    %229 = arith.subf %227, %228 : vector<8x128xf32>
    %230 = arith.mulf %203, %213 : vector<8x128xf32>
    %231 = arith.mulf %221, %211 : vector<8x128xf32>
    %232 = arith.subf %230, %231 : vector<8x128xf32>
    %233 = arith.mulf %219, %226 : vector<8x128xf32>
    %234 = arith.mulf %199, %229 : vector<8x128xf32>
    %235 = arith.addf %233, %234 : vector<8x128xf32>
    %236 = arith.mulf %201, %232 : vector<8x128xf32>
    %237 = arith.addf %235, %236 : vector<8x128xf32>
    %238 = tpu.reciprocal %237 {approx = true} : vector<8x128xf32> -> vector<8x128xf32>
    %239 = arith.mulf %237, %238 : vector<8x128xf32>
    %cst_86 = arith.constant 2.000000e+00 : f32
    %240 = vector.broadcast %cst_86 : f32 to vector<8x128xf32>
    %241 = arith.subf %240, %239 : vector<8x128xf32>
    %242 = arith.mulf %238, %241 : vector<8x128xf32>
    %243 = arith.mulf %226, %242 : vector<8x128xf32>
    %244 = arith.mulf %201, %213 : vector<8x128xf32>
    %245 = arith.mulf %199, %223 : vector<8x128xf32>
    %246 = arith.subf %244, %245 : vector<8x128xf32>
    %247 = arith.mulf %246, %242 : vector<8x128xf32>
    %248 = arith.mulf %199, %209 : vector<8x128xf32>
    %249 = arith.mulf %201, %221 : vector<8x128xf32>
    %250 = arith.subf %248, %249 : vector<8x128xf32>
    %251 = arith.mulf %250, %242 : vector<8x128xf32>
    %252 = arith.mulf %229, %242 : vector<8x128xf32>
    %253 = arith.mulf %219, %223 : vector<8x128xf32>
    %254 = arith.mulf %201, %211 : vector<8x128xf32>
    %255 = arith.subf %253, %254 : vector<8x128xf32>
    %256 = arith.mulf %255, %242 : vector<8x128xf32>
    %257 = arith.mulf %201, %203 : vector<8x128xf32>
    %258 = arith.mulf %219, %209 : vector<8x128xf32>
    %259 = arith.subf %257, %258 : vector<8x128xf32>
    %260 = arith.mulf %259, %242 : vector<8x128xf32>
    %261 = arith.mulf %232, %242 : vector<8x128xf32>
    %262 = arith.mulf %199, %211 : vector<8x128xf32>
    %263 = arith.mulf %219, %213 : vector<8x128xf32>
    %264 = arith.subf %262, %263 : vector<8x128xf32>
    %265 = arith.mulf %264, %242 : vector<8x128xf32>
    %266 = arith.mulf %219, %221 : vector<8x128xf32>
    %267 = arith.mulf %199, %203 : vector<8x128xf32>
    %268 = arith.subf %266, %267 : vector<8x128xf32>
    %269 = arith.mulf %268, %242 : vector<8x128xf32>
    %270 = arith.subf %176, %187 : vector<8x128xf32>
    %271 = arith.subf %180, %190 : vector<8x128xf32>
    %272 = arith.subf %184, %193 : vector<8x128xf32>
    %273 = arith.mulf %243, %270 : vector<8x128xf32>
    %274 = arith.mulf %247, %271 : vector<8x128xf32>
    %275 = arith.addf %273, %274 : vector<8x128xf32>
    %276 = arith.mulf %251, %272 : vector<8x128xf32>
    %277 = arith.addf %275, %276 : vector<8x128xf32>
    %278 = arith.mulf %252, %270 : vector<8x128xf32>
    %279 = arith.mulf %256, %271 : vector<8x128xf32>
    %280 = arith.addf %278, %279 : vector<8x128xf32>
    %281 = arith.mulf %260, %272 : vector<8x128xf32>
    %282 = arith.addf %280, %281 : vector<8x128xf32>
    %283 = arith.mulf %261, %270 : vector<8x128xf32>
    %284 = arith.mulf %265, %271 : vector<8x128xf32>
    %285 = arith.addf %283, %284 : vector<8x128xf32>
    %286 = arith.mulf %269, %272 : vector<8x128xf32>
    %287 = arith.addf %285, %286 : vector<8x128xf32>
    %288 = arith.mulf %197, %277 : vector<8x128xf32>
    %289 = arith.addf %187, %288 : vector<8x128xf32>
    %290 = arith.mulf %199, %282 : vector<8x128xf32>
    %291 = arith.addf %289, %290 : vector<8x128xf32>
    %292 = arith.mulf %201, %287 : vector<8x128xf32>
    %293 = arith.addf %291, %292 : vector<8x128xf32>
    %294 = arith.mulf %203, %277 : vector<8x128xf32>
    %295 = arith.addf %190, %294 : vector<8x128xf32>
    %296 = arith.mulf %207, %282 : vector<8x128xf32>
    %297 = arith.addf %295, %296 : vector<8x128xf32>
    %298 = arith.mulf %209, %287 : vector<8x128xf32>
    %299 = arith.addf %297, %298 : vector<8x128xf32>
    %300 = arith.mulf %211, %277 : vector<8x128xf32>
    %301 = arith.addf %193, %300 : vector<8x128xf32>
    %302 = arith.mulf %213, %282 : vector<8x128xf32>
    %303 = arith.addf %301, %302 : vector<8x128xf32>
    %304 = arith.mulf %217, %287 : vector<8x128xf32>
    %305 = arith.addf %303, %304 : vector<8x128xf32>
    %306 = arith.mulf %243, %197 : vector<8x128xf32>
    %307 = arith.mulf %247, %203 : vector<8x128xf32>
    %308 = arith.addf %306, %307 : vector<8x128xf32>
    %309 = arith.mulf %251, %211 : vector<8x128xf32>
    %310 = arith.addf %308, %309 : vector<8x128xf32>
    %311 = arith.mulf %243, %199 : vector<8x128xf32>
    %312 = arith.mulf %247, %207 : vector<8x128xf32>
    %313 = arith.addf %311, %312 : vector<8x128xf32>
    %314 = arith.mulf %251, %213 : vector<8x128xf32>
    %315 = arith.addf %313, %314 : vector<8x128xf32>
    %316 = arith.mulf %243, %201 : vector<8x128xf32>
    %317 = arith.mulf %247, %209 : vector<8x128xf32>
    %318 = arith.addf %316, %317 : vector<8x128xf32>
    %319 = arith.mulf %251, %217 : vector<8x128xf32>
    %320 = arith.addf %318, %319 : vector<8x128xf32>
    %321 = arith.mulf %252, %197 : vector<8x128xf32>
    %322 = arith.mulf %256, %203 : vector<8x128xf32>
    %323 = arith.addf %321, %322 : vector<8x128xf32>
    %324 = arith.mulf %260, %211 : vector<8x128xf32>
    %325 = arith.addf %323, %324 : vector<8x128xf32>
    %326 = arith.mulf %252, %199 : vector<8x128xf32>
    %327 = arith.mulf %256, %207 : vector<8x128xf32>
    %328 = arith.addf %326, %327 : vector<8x128xf32>
    %329 = arith.mulf %260, %213 : vector<8x128xf32>
    %330 = arith.addf %328, %329 : vector<8x128xf32>
    %331 = arith.mulf %252, %201 : vector<8x128xf32>
    %332 = arith.mulf %256, %209 : vector<8x128xf32>
    %333 = arith.addf %331, %332 : vector<8x128xf32>
    %334 = arith.mulf %260, %217 : vector<8x128xf32>
    %335 = arith.addf %333, %334 : vector<8x128xf32>
    %336 = arith.mulf %261, %197 : vector<8x128xf32>
    %337 = arith.mulf %265, %203 : vector<8x128xf32>
    %338 = arith.addf %336, %337 : vector<8x128xf32>
    %339 = arith.mulf %269, %211 : vector<8x128xf32>
    %340 = arith.addf %338, %339 : vector<8x128xf32>
    %341 = arith.mulf %261, %199 : vector<8x128xf32>
    %342 = arith.mulf %265, %207 : vector<8x128xf32>
    %343 = arith.addf %341, %342 : vector<8x128xf32>
    %344 = arith.mulf %269, %213 : vector<8x128xf32>
    %345 = arith.addf %343, %344 : vector<8x128xf32>
    %346 = arith.mulf %261, %201 : vector<8x128xf32>
    %347 = arith.mulf %265, %209 : vector<8x128xf32>
    %348 = arith.addf %346, %347 : vector<8x128xf32>
    %349 = arith.mulf %269, %217 : vector<8x128xf32>
    %350 = arith.addf %348, %349 : vector<8x128xf32>
    %351 = arith.mulf %197, %310 : vector<8x128xf32>
    %352 = arith.mulf %199, %325 : vector<8x128xf32>
    %353 = arith.addf %351, %352 : vector<8x128xf32>
    %354 = arith.mulf %201, %340 : vector<8x128xf32>
    %355 = arith.addf %353, %354 : vector<8x128xf32>
    %356 = arith.subf %197, %355 : vector<8x128xf32>
    %c7_87 = arith.constant 7 : index
    %c0_88 = arith.constant 0 : index
    %c0_89 = arith.constant 0 : index
    %357 = vector.load %arg3[%c7_87, %c0_88, %c0_89] : memref<25x8x128xf32, #tpu.memory_space<vmem>>, vector<1x8x128xf32>
    %358 = vector.shape_cast %357 : vector<1x8x128xf32> to vector<8x128xf32>
    %359 = vector.shape_cast %356 : vector<8x128xf32> to vector<1x8x128xf32>
    tpu.vector_store %arg3[%c7_87, %c0_88, %c0_89], %359 {strides = array<i32>} : memref<25x8x128xf32, #tpu.memory_space<vmem>>, vector<1x8x128xf32>,
    %360 = arith.mulf %197, %315 : vector<8x128xf32>
    %361 = arith.mulf %199, %330 : vector<8x128xf32>
    %362 = arith.addf %360, %361 : vector<8x128xf32>
    %363 = arith.mulf %201, %345 : vector<8x128xf32>
    %364 = arith.addf %362, %363 : vector<8x128xf32>
    %365 = arith.subf %199, %364 : vector<8x128xf32>
    %c8_90 = arith.constant 8 : index
    %c0_91 = arith.constant 0 : index
    %c0_92 = arith.constant 0 : index
    %366 = vector.load %arg3[%c8_90, %c0_91, %c0_92] : memref<25x8x128xf32, #tpu.memory_space<vmem>>, vector<1x8x128xf32>
    %367 = vector.shape_cast %366 : vector<1x8x128xf32> to vector<8x128xf32>
    %368 = vector.shape_cast %365 : vector<8x128xf32> to vector<1x8x128xf32>
    tpu.vector_store %arg3[%c8_90, %c0_91, %c0_92], %368 {strides = array<i32>} : memref<25x8x128xf32, #tpu.memory_space<vmem>>, vector<1x8x128xf32>,
    %369 = arith.mulf %197, %320 : vector<8x128xf32>
    %370 = arith.mulf %199, %335 : vector<8x128xf32>
    %371 = arith.addf %369, %370 : vector<8x128xf32>
    %372 = arith.mulf %201, %350 : vector<8x128xf32>
    %373 = arith.addf %371, %372 : vector<8x128xf32>
    %374 = arith.subf %201, %373 : vector<8x128xf32>
    %c9_93 = arith.constant 9 : index
    %c0_94 = arith.constant 0 : index
    %c0_95 = arith.constant 0 : index
    %375 = vector.load %arg3[%c9_93, %c0_94, %c0_95] : memref<25x8x128xf32, #tpu.memory_space<vmem>>, vector<1x8x128xf32>
    %376 = vector.shape_cast %375 : vector<1x8x128xf32> to vector<8x128xf32>
    %377 = vector.shape_cast %374 : vector<8x128xf32> to vector<1x8x128xf32>
    tpu.vector_store %arg3[%c9_93, %c0_94, %c0_95], %377 {strides = array<i32>} : memref<25x8x128xf32, #tpu.memory_space<vmem>>, vector<1x8x128xf32>,
    %378 = arith.mulf %203, %310 : vector<8x128xf32>
    %379 = arith.mulf %207, %325 : vector<8x128xf32>
    %380 = arith.addf %378, %379 : vector<8x128xf32>
    %381 = arith.mulf %209, %340 : vector<8x128xf32>
    %382 = arith.addf %380, %381 : vector<8x128xf32>
    %383 = arith.subf %203, %382 : vector<8x128xf32>
    %c10_96 = arith.constant 10 : index
    %c0_97 = arith.constant 0 : index
    %c0_98 = arith.constant 0 : index
    %384 = vector.load %arg3[%c10_96, %c0_97, %c0_98] : memref<25x8x128xf32, #tpu.memory_space<vmem>>, vector<1x8x128xf32>
    %385 = vector.shape_cast %384 : vector<1x8x128xf32> to vector<8x128xf32>
    %386 = vector.shape_cast %383 : vector<8x128xf32> to vector<1x8x128xf32>
    tpu.vector_store %arg3[%c10_96, %c0_97, %c0_98], %386 {strides = array<i32>} : memref<25x8x128xf32, #tpu.memory_space<vmem>>, vector<1x8x128xf32>,
    %387 = arith.mulf %203, %315 : vector<8x128xf32>
    %388 = arith.mulf %207, %330 : vector<8x128xf32>
    %389 = arith.addf %387, %388 : vector<8x128xf32>
    %390 = arith.mulf %209, %345 : vector<8x128xf32>
    %391 = arith.addf %389, %390 : vector<8x128xf32>
    %392 = arith.subf %207, %391 : vector<8x128xf32>
    %c11_99 = arith.constant 11 : index
    %c0_100 = arith.constant 0 : index
    %c0_101 = arith.constant 0 : index
    %393 = vector.load %arg3[%c11_99, %c0_100, %c0_101] : memref<25x8x128xf32, #tpu.memory_space<vmem>>, vector<1x8x128xf32>
    %394 = vector.shape_cast %393 : vector<1x8x128xf32> to vector<8x128xf32>
    %395 = vector.shape_cast %392 : vector<8x128xf32> to vector<1x8x128xf32>
    tpu.vector_store %arg3[%c11_99, %c0_100, %c0_101], %395 {strides = array<i32>} : memref<25x8x128xf32, #tpu.memory_space<vmem>>, vector<1x8x128xf32>,
    %396 = arith.mulf %203, %320 : vector<8x128xf32>
    %397 = arith.mulf %207, %335 : vector<8x128xf32>
    %398 = arith.addf %396, %397 : vector<8x128xf32>
    %399 = arith.mulf %209, %350 : vector<8x128xf32>
    %400 = arith.addf %398, %399 : vector<8x128xf32>
    %401 = arith.subf %209, %400 : vector<8x128xf32>
    %c12_102 = arith.constant 12 : index
    %c0_103 = arith.constant 0 : index
    %c0_104 = arith.constant 0 : index
    %402 = vector.load %arg3[%c12_102, %c0_103, %c0_104] : memref<25x8x128xf32, #tpu.memory_space<vmem>>, vector<1x8x128xf32>
    %403 = vector.shape_cast %402 : vector<1x8x128xf32> to vector<8x128xf32>
    %404 = vector.shape_cast %401 : vector<8x128xf32> to vector<1x8x128xf32>
    tpu.vector_store %arg3[%c12_102, %c0_103, %c0_104], %404 {strides = array<i32>} : memref<25x8x128xf32, #tpu.memory_space<vmem>>, vector<1x8x128xf32>,
    %405 = arith.mulf %211, %310 : vector<8x128xf32>
    %406 = arith.mulf %213, %325 : vector<8x128xf32>
    %407 = arith.addf %405, %406 : vector<8x128xf32>
    %408 = arith.mulf %217, %340 : vector<8x128xf32>
    %409 = arith.addf %407, %408 : vector<8x128xf32>
    %410 = arith.subf %211, %409 : vector<8x128xf32>
    %c13_105 = arith.constant 13 : index
    %c0_106 = arith.constant 0 : index
    %c0_107 = arith.constant 0 : index
    %411 = vector.load %arg3[%c13_105, %c0_106, %c0_107] : memref<25x8x128xf32, #tpu.memory_space<vmem>>, vector<1x8x128xf32>
    %412 = vector.shape_cast %411 : vector<1x8x128xf32> to vector<8x128xf32>
    %413 = vector.shape_cast %410 : vector<8x128xf32> to vector<1x8x128xf32>
    tpu.vector_store %arg3[%c13_105, %c0_106, %c0_107], %413 {strides = array<i32>} : memref<25x8x128xf32, #tpu.memory_space<vmem>>, vector<1x8x128xf32>,
    %414 = arith.mulf %211, %315 : vector<8x128xf32>
    %415 = arith.mulf %213, %330 : vector<8x128xf32>
    %416 = arith.addf %414, %415 : vector<8x128xf32>
    %417 = arith.mulf %217, %345 : vector<8x128xf32>
    %418 = arith.addf %416, %417 : vector<8x128xf32>
    %419 = arith.subf %213, %418 : vector<8x128xf32>
    %c14_108 = arith.constant 14 : index
    %c0_109 = arith.constant 0 : index
    %c0_110 = arith.constant 0 : index
    %420 = vector.load %arg3[%c14_108, %c0_109, %c0_110] : memref<25x8x128xf32, #tpu.memory_space<vmem>>, vector<1x8x128xf32>
    %421 = vector.shape_cast %420 : vector<1x8x128xf32> to vector<8x128xf32>
    %422 = vector.shape_cast %419 : vector<8x128xf32> to vector<1x8x128xf32>
    tpu.vector_store %arg3[%c14_108, %c0_109, %c0_110], %422 {strides = array<i32>} : memref<25x8x128xf32, #tpu.memory_space<vmem>>, vector<1x8x128xf32>,
    %423 = arith.mulf %211, %320 : vector<8x128xf32>
    %424 = arith.mulf %213, %335 : vector<8x128xf32>
    %425 = arith.addf %423, %424 : vector<8x128xf32>
    %426 = arith.mulf %217, %350 : vector<8x128xf32>
    %427 = arith.addf %425, %426 : vector<8x128xf32>
    %428 = arith.subf %217, %427 : vector<8x128xf32>
    %c15 = arith.constant 15 : index
    %c0_111 = arith.constant 0 : index
    %c0_112 = arith.constant 0 : index
    %429 = vector.load %arg3[%c15, %c0_111, %c0_112] : memref<25x8x128xf32, #tpu.memory_space<vmem>>, vector<1x8x128xf32>
    %430 = vector.shape_cast %429 : vector<1x8x128xf32> to vector<8x128xf32>
    %431 = vector.shape_cast %428 : vector<8x128xf32> to vector<1x8x128xf32>
    tpu.vector_store %arg3[%c15, %c0_111, %c0_112], %431 {strides = array<i32>} : memref<25x8x128xf32, #tpu.memory_space<vmem>>, vector<1x8x128xf32>,
    %c4_113 = arith.constant 4 : index
    %c0_114 = arith.constant 0 : index
    %c0_115 = arith.constant 0 : index
    %432 = vector.load %arg3[%c4_113, %c0_114, %c0_115] : memref<25x8x128xf32, #tpu.memory_space<vmem>>, vector<1x8x128xf32>
    %433 = vector.shape_cast %432 : vector<1x8x128xf32> to vector<8x128xf32>
    %434 = vector.shape_cast %293 : vector<8x128xf32> to vector<1x8x128xf32>
    tpu.vector_store %arg3[%c4_113, %c0_114, %c0_115], %434 {strides = array<i32>} : memref<25x8x128xf32, #tpu.memory_space<vmem>>, vector<1x8x128xf32>,
    %c5_116 = arith.constant 5 : index
    %c0_117 = arith.constant 0 : index
    %c0_118 = arith.constant 0 : index
    %435 = vector.load %arg3[%c5_116, %c0_117, %c0_118] : memref<25x8x128xf32, #tpu.memory_space<vmem>>, vector<1x8x128xf32>
    %436 = vector.shape_cast %435 : vector<1x8x128xf32> to vector<8x128xf32>
    %437 = vector.shape_cast %299 : vector<8x128xf32> to vector<1x8x128xf32>
    tpu.vector_store %arg3[%c5_116, %c0_117, %c0_118], %437 {strides = array<i32>} : memref<25x8x128xf32, #tpu.memory_space<vmem>>, vector<1x8x128xf32>,
    %c6_119 = arith.constant 6 : index
    %c0_120 = arith.constant 0 : index
    %c0_121 = arith.constant 0 : index
    %438 = vector.load %arg3[%c6_119, %c0_120, %c0_121] : memref<25x8x128xf32, #tpu.memory_space<vmem>>, vector<1x8x128xf32>
    %439 = vector.shape_cast %438 : vector<1x8x128xf32> to vector<8x128xf32>
    %440 = vector.shape_cast %305 : vector<8x128xf32> to vector<1x8x128xf32>
    tpu.vector_store %arg3[%c6_119, %c0_120, %c0_121], %440 {strides = array<i32>} : memref<25x8x128xf32, #tpu.memory_space<vmem>>, vector<1x8x128xf32>,
    %c15_122 = arith.constant 15 : index
    %c0_123 = arith.constant 0 : index
    %c0_124 = arith.constant 0 : index
    %441 = vector.load %arg2[%c15_122, %c0_123, %c0_124] : memref<58x8x128xf32, #tpu.memory_space<vmem>>, vector<1x8x128xf32>
    %442 = vector.shape_cast %441 : vector<1x8x128xf32> to vector<8x128xf32>
    %c18 = arith.constant 18 : index
    %c0_125 = arith.constant 0 : index
    %c0_126 = arith.constant 0 : index
    %443 = vector.load %arg2[%c18, %c0_125, %c0_126] : memref<58x8x128xf32, #tpu.memory_space<vmem>>, vector<1x8x128xf32>
    %444 = vector.shape_cast %443 : vector<1x8x128xf32> to vector<8x128xf32>
    %445 = arith.addf %442, %293 : vector<8x128xf32>
    %446 = math.absf %442 : vector<8x128xf32>
    %447 = math.absf %293 : vector<8x128xf32>
    %448 = arith.cmpf oge, %446, %447 : vector<8x128xf32>
    %449 = arith.subf %442, %445 : vector<8x128xf32>
    %450 = arith.addf %449, %293 : vector<8x128xf32>
    %451 = arith.subf %293, %445 : vector<8x128xf32>
    %452 = arith.addf %451, %442 : vector<8x128xf32>
    %453 = arith.select %448, %450, %452 : vector<8x128xi1>, vector<8x128xf32>
    %454 = arith.addf %444, %453 : vector<8x128xf32>
    %455 = arith.addf %445, %454 : vector<8x128xf32>
    %456 = vector.broadcast %2 : f32 to vector<8x128xf32>
    %457 = arith.mulf %455, %456 : vector<8x128xf32>
    %c16 = arith.constant 16 : index
    %c0_127 = arith.constant 0 : index
    %c0_128 = arith.constant 0 : index
    %458 = vector.load %arg2[%c16, %c0_127, %c0_128] : memref<58x8x128xf32, #tpu.memory_space<vmem>>, vector<1x8x128xf32>
    %459 = vector.shape_cast %458 : vector<1x8x128xf32> to vector<8x128xf32>
    %c19 = arith.constant 19 : index
    %c0_129 = arith.constant 0 : index
    %c0_130 = arith.constant 0 : index
    %460 = vector.load %arg2[%c19, %c0_129, %c0_130] : memref<58x8x128xf32, #tpu.memory_space<vmem>>, vector<1x8x128xf32>
    %461 = vector.shape_cast %460 : vector<1x8x128xf32> to vector<8x128xf32>
    %462 = arith.addf %459, %299 : vector<8x128xf32>
    %463 = math.absf %459 : vector<8x128xf32>
    %464 = math.absf %299 : vector<8x128xf32>
    %465 = arith.cmpf oge, %463, %464 : vector<8x128xf32>
    %466 = arith.subf %459, %462 : vector<8x128xf32>
    %467 = arith.addf %466, %299 : vector<8x128xf32>
    %468 = arith.subf %299, %462 : vector<8x128xf32>
    %469 = arith.addf %468, %459 : vector<8x128xf32>
    %470 = arith.select %465, %467, %469 : vector<8x128xi1>, vector<8x128xf32>
    %471 = arith.addf %461, %470 : vector<8x128xf32>
    %472 = arith.addf %462, %471 : vector<8x128xf32>
    %473 = vector.broadcast %2 : f32 to vector<8x128xf32>
    %474 = arith.mulf %472, %473 : vector<8x128xf32>
    %c17 = arith.constant 17 : index
    %c0_131 = arith.constant 0 : index
    %c0_132 = arith.constant 0 : index
    %475 = vector.load %arg2[%c17, %c0_131, %c0_132] : memref<58x8x128xf32, #tpu.memory_space<vmem>>, vector<1x8x128xf32>
    %476 = vector.shape_cast %475 : vector<1x8x128xf32> to vector<8x128xf32>
    %c20 = arith.constant 20 : index
    %c0_133 = arith.constant 0 : index
    %c0_134 = arith.constant 0 : index
    %477 = vector.load %arg2[%c20, %c0_133, %c0_134] : memref<58x8x128xf32, #tpu.memory_space<vmem>>, vector<1x8x128xf32>
    %478 = vector.shape_cast %477 : vector<1x8x128xf32> to vector<8x128xf32>
    %479 = arith.addf %476, %305 : vector<8x128xf32>
    %480 = math.absf %476 : vector<8x128xf32>
    %481 = math.absf %305 : vector<8x128xf32>
    %482 = arith.cmpf oge, %480, %481 : vector<8x128xf32>
    %483 = arith.subf %476, %479 : vector<8x128xf32>
    %484 = arith.addf %483, %305 : vector<8x128xf32>
    %485 = arith.subf %305, %479 : vector<8x128xf32>
    %486 = arith.addf %485, %476 : vector<8x128xf32>
    %487 = arith.select %482, %484, %486 : vector<8x128xi1>, vector<8x128xf32>
    %488 = arith.addf %478, %487 : vector<8x128xf32>
    %489 = arith.addf %479, %488 : vector<8x128xf32>
    %490 = vector.broadcast %2 : f32 to vector<8x128xf32>
    %491 = arith.mulf %489, %490 : vector<8x128xf32>
    %c16_135 = arith.constant 16 : index
    %c0_136 = arith.constant 0 : index
    %c0_137 = arith.constant 0 : index
    %492 = vector.load %arg3[%c16_135, %c0_136, %c0_137] : memref<25x8x128xf32, #tpu.memory_space<vmem>>, vector<1x8x128xf32>
    %493 = vector.shape_cast %492 : vector<1x8x128xf32> to vector<8x128xf32>
    %494 = vector.shape_cast %445 : vector<8x128xf32> to vector<1x8x128xf32>
    tpu.vector_store %arg3[%c16_135, %c0_136, %c0_137], %494 {strides = array<i32>} : memref<25x8x128xf32, #tpu.memory_space<vmem>>, vector<1x8x128xf32>,
    %c17_138 = arith.constant 17 : index
    %c0_139 = arith.constant 0 : index
    %c0_140 = arith.constant 0 : index
    %495 = vector.load %arg3[%c17_138, %c0_139, %c0_140] : memref<25x8x128xf32, #tpu.memory_space<vmem>>, vector<1x8x128xf32>
    %496 = vector.shape_cast %495 : vector<1x8x128xf32> to vector<8x128xf32>
    %497 = vector.shape_cast %462 : vector<8x128xf32> to vector<1x8x128xf32>
    tpu.vector_store %arg3[%c17_138, %c0_139, %c0_140], %497 {strides = array<i32>} : memref<25x8x128xf32, #tpu.memory_space<vmem>>, vector<1x8x128xf32>,
    %c18_141 = arith.constant 18 : index
    %c0_142 = arith.constant 0 : index
    %c0_143 = arith.constant 0 : index
    %498 = vector.load %arg3[%c18_141, %c0_142, %c0_143] : memref<25x8x128xf32, #tpu.memory_space<vmem>>, vector<1x8x128xf32>
    %499 = vector.shape_cast %498 : vector<1x8x128xf32> to vector<8x128xf32>
    %500 = vector.shape_cast %479 : vector<8x128xf32> to vector<1x8x128xf32>
    tpu.vector_store %arg3[%c18_141, %c0_142, %c0_143], %500 {strides = array<i32>} : memref<25x8x128xf32, #tpu.memory_space<vmem>>, vector<1x8x128xf32>,
    %c19_144 = arith.constant 19 : index
    %c0_145 = arith.constant 0 : index
    %c0_146 = arith.constant 0 : index
    %501 = vector.load %arg3[%c19_144, %c0_145, %c0_146] : memref<25x8x128xf32, #tpu.memory_space<vmem>>, vector<1x8x128xf32>
    %502 = vector.shape_cast %501 : vector<1x8x128xf32> to vector<8x128xf32>
    %503 = vector.shape_cast %454 : vector<8x128xf32> to vector<1x8x128xf32>
    tpu.vector_store %arg3[%c19_144, %c0_145, %c0_146], %503 {strides = array<i32>} : memref<25x8x128xf32, #tpu.memory_space<vmem>>, vector<1x8x128xf32>,
    %c20_147 = arith.constant 20 : index
    %c0_148 = arith.constant 0 : index
    %c0_149 = arith.constant 0 : index
    %504 = vector.load %arg3[%c20_147, %c0_148, %c0_149] : memref<25x8x128xf32, #tpu.memory_space<vmem>>, vector<1x8x128xf32>
    %505 = vector.shape_cast %504 : vector<1x8x128xf32> to vector<8x128xf32>
    %506 = vector.shape_cast %471 : vector<8x128xf32> to vector<1x8x128xf32>
    tpu.vector_store %arg3[%c20_147, %c0_148, %c0_149], %506 {strides = array<i32>} : memref<25x8x128xf32, #tpu.memory_space<vmem>>, vector<1x8x128xf32>,
    %c21_150 = arith.constant 21 : index
    %c0_151 = arith.constant 0 : index
    %c0_152 = arith.constant 0 : index
    %507 = vector.load %arg3[%c21_150, %c0_151, %c0_152] : memref<25x8x128xf32, #tpu.memory_space<vmem>>, vector<1x8x128xf32>
    %508 = vector.shape_cast %507 : vector<1x8x128xf32> to vector<8x128xf32>
    %509 = vector.shape_cast %488 : vector<8x128xf32> to vector<1x8x128xf32>
    tpu.vector_store %arg3[%c21_150, %c0_151, %c0_152], %509 {strides = array<i32>} : memref<25x8x128xf32, #tpu.memory_space<vmem>>, vector<1x8x128xf32>,
    %c22 = arith.constant 22 : index
    %c0_153 = arith.constant 0 : index
    %c0_154 = arith.constant 0 : index
    %510 = vector.load %arg3[%c22, %c0_153, %c0_154] : memref<25x8x128xf32, #tpu.memory_space<vmem>>, vector<1x8x128xf32>
    %511 = vector.shape_cast %510 : vector<1x8x128xf32> to vector<8x128xf32>
    %512 = vector.shape_cast %457 : vector<8x128xf32> to vector<1x8x128xf32>
    tpu.vector_store %arg3[%c22, %c0_153, %c0_154], %512 {strides = array<i32>} : memref<25x8x128xf32, #tpu.memory_space<vmem>>, vector<1x8x128xf32>,
    %c23 = arith.constant 23 : index
    %c0_155 = arith.constant 0 : index
    %c0_156 = arith.constant 0 : index
    %513 = vector.load %arg3[%c23, %c0_155, %c0_156] : memref<25x8x128xf32, #tpu.memory_space<vmem>>, vector<1x8x128xf32>
    %514 = vector.shape_cast %513 : vector<1x8x128xf32> to vector<8x128xf32>
    %515 = vector.shape_cast %474 : vector<8x128xf32> to vector<1x8x128xf32>
    tpu.vector_store %arg3[%c23, %c0_155, %c0_156], %515 {strides = array<i32>} : memref<25x8x128xf32, #tpu.memory_space<vmem>>, vector<1x8x128xf32>,
    %c24 = arith.constant 24 : index
    %c0_157 = arith.constant 0 : index
    %c0_158 = arith.constant 0 : index
    %516 = vector.load %arg3[%c24, %c0_157, %c0_158] : memref<25x8x128xf32, #tpu.memory_space<vmem>>, vector<1x8x128xf32>
    %517 = vector.shape_cast %516 : vector<1x8x128xf32> to vector<8x128xf32>
    %518 = vector.shape_cast %491 : vector<8x128xf32> to vector<1x8x128xf32>
    tpu.vector_store %arg3[%c24, %c0_157, %c0_158], %518 {strides = array<i32>} : memref<25x8x128xf32, #tpu.memory_space<vmem>>, vector<1x8x128xf32>,
    %519 = arith.mulf %17, %457 : vector<8x128xf32>
    %520 = arith.mulf %21, %474 : vector<8x128xf32>
    %521 = arith.addf %519, %520 : vector<8x128xf32>
    %522 = arith.mulf %25, %491 : vector<8x128xf32>
    %523 = arith.addf %521, %522 : vector<8x128xf32>
    %c0_159 = arith.constant 0 : index
    %c0_160 = arith.constant 0 : index
    %c0_161 = arith.constant 0 : index
    %524 = vector.load %arg3[%c0_159, %c0_160, %c0_161] : memref<25x8x128xf32, #tpu.memory_space<vmem>>, vector<1x8x128xf32>
    %525 = vector.shape_cast %524 : vector<1x8x128xf32> to vector<8x128xf32>
    %526 = vector.shape_cast %523 : vector<8x128xf32> to vector<1x8x128xf32>
    tpu.vector_store %arg3[%c0_159, %c0_160, %c0_161], %526 {strides = array<i32>} : memref<25x8x128xf32, #tpu.memory_space<vmem>>, vector<1x8x128xf32>,
    %527 = arith.mulf %26, %457 : vector<8x128xf32>
    %528 = arith.mulf %30, %474 : vector<8x128xf32>
    %529 = arith.addf %527, %528 : vector<8x128xf32>
    %530 = arith.mulf %34, %491 : vector<8x128xf32>
    %531 = arith.addf %529, %530 : vector<8x128xf32>
    %c1_162 = arith.constant 1 : index
    %c0_163 = arith.constant 0 : index
    %c0_164 = arith.constant 0 : index
    %532 = vector.load %arg3[%c1_162, %c0_163, %c0_164] : memref<25x8x128xf32, #tpu.memory_space<vmem>>, vector<1x8x128xf32>
    %533 = vector.shape_cast %532 : vector<1x8x128xf32> to vector<8x128xf32>
    %534 = vector.shape_cast %531 : vector<8x128xf32> to vector<1x8x128xf32>
    tpu.vector_store %arg3[%c1_162, %c0_163, %c0_164], %534 {strides = array<i32>} : memref<25x8x128xf32, #tpu.memory_space<vmem>>, vector<1x8x128xf32>,
    %535 = arith.mulf %36, %457 : vector<8x128xf32>
    %536 = arith.mulf %37, %474 : vector<8x128xf32>
    %537 = arith.addf %535, %536 : vector<8x128xf32>
    %538 = arith.mulf %38, %491 : vector<8x128xf32>
    %539 = arith.addf %537, %538 : vector<8x128xf32>
    %c2_165 = arith.constant 2 : index
    %c0_166 = arith.constant 0 : index
    %c0_167 = arith.constant 0 : index
    %540 = vector.load %arg3[%c2_165, %c0_166, %c0_167] : memref<25x8x128xf32, #tpu.memory_space<vmem>>, vector<1x8x128xf32>
    %541 = vector.shape_cast %540 : vector<1x8x128xf32> to vector<8x128xf32>
    %542 = vector.shape_cast %539 : vector<8x128xf32> to vector<1x8x128xf32>
    tpu.vector_store %arg3[%c2_165, %c0_166, %c0_167], %542 {strides = array<i32>} : memref<25x8x128xf32, #tpu.memory_space<vmem>>, vector<1x8x128xf32>,
    %543 = vector.shape_cast %36 : vector<8x128xf32> to vector<1x8x128xf32>
    %544 = vector.broadcast %543 : vector<1x8x128xf32> to vector<4x8x128xf32>
    %545 = arith.mulf %544, %100 : vector<4x8x128xf32>
    %546 = vector.shape_cast %37 : vector<8x128xf32> to vector<1x8x128xf32>
    %547 = vector.broadcast %546 : vector<1x8x128xf32> to vector<4x8x128xf32>
    %548 = arith.mulf %547, %101 : vector<4x8x128xf32>
    %549 = arith.addf %545, %548 : vector<4x8x128xf32>
    %550 = vector.shape_cast %38 : vector<8x128xf32> to vector<1x8x128xf32>
    %551 = vector.broadcast %550 : vector<1x8x128xf32> to vector<4x8x128xf32>
    %552 = arith.mulf %551, %102 : vector<4x8x128xf32>
    %553 = arith.addf %549, %552 : vector<4x8x128xf32>
    %554 = arith.select %70, %553, %103 : vector<4x8x128xi1>, vector<4x8x128xf32>
    %cst_168 = arith.constant dense<0.000000e+00> : vector<8x128xf32>
    %555 = vector.multi_reduction <add>, %554, %cst_168 [0] : vector<4x8x128xf32> to vector<8x128xf32>
    %556 = arith.mulf %555, %90 : vector<8x128xf32>
    %cst_169 = arith.constant 0.000000e+00 : f32
    %557 = vector.broadcast %cst_169 : f32 to vector<8x128xf32>
    %558 = arith.select %73, %556, %557 : vector<8x128xi1>, vector<8x128xf32>
    %559 = vector.broadcast %1 : f32 to vector<8x128xf32>
    %560 = arith.mulf %77, %559 : vector<8x128xf32>
    %561 = arith.mulf %75, %558 : vector<8x128xf32>
    %562 = arith.subf %560, %561 : vector<8x128xf32>
    %c3_170 = arith.constant 3 : index
    %c0_171 = arith.constant 0 : index
    %c0_172 = arith.constant 0 : index
    %563 = vector.load %arg3[%c3_170, %c0_171, %c0_172] : memref<25x8x128xf32, #tpu.memory_space<vmem>>, vector<1x8x128xf32>
    %564 = vector.shape_cast %563 : vector<1x8x128xf32> to vector<8x128xf32>
    %565 = vector.shape_cast %562 : vector<8x128xf32> to vector<1x8x128xf32>
    tpu.vector_store %arg3[%c3_170, %c0_171, %c0_172], %565 {strides = array<i32>} : memref<25x8x128xf32, #tpu.memory_space<vmem>>, vector<1x8x128xf32>,
    return
  }
  func.func @transform_0(%arg0: i32) -> i32 {
    %c0_i32 = arith.constant 0 : i32
    %c0_i32_0 = arith.constant 0 : i32
    return %c0_i32 : i32
  }
  func.func @transform_1(%arg0: i32) -> (i32, i32, i32) {
    %c0_i32 = arith.constant 0 : i32
    %c0_i32_0 = arith.constant 0 : i32
    %c0_i32_1 = arith.constant 0 : i32
    return %c0_i32, %arg0, %c0_i32_0 : i32, i32, i32
  }
  func.func @transform_2(%arg0: i32) -> (i32, i32, i32) {
    %c0_i32 = arith.constant 0 : i32
    %c0_i32_0 = arith.constant 0 : i32
    %c0_i32_1 = arith.constant 0 : i32
    return %c0_i32, %arg0, %c0_i32_0 : i32, i32, i32
  }
}

</mosaic_0001>

<llo_original>
// kernel: tpu_custom_call.1
$region0: #{tpu_custom_call.1}
  #allocation0 [shape = 'u32[]', space=smem, size = 0x4, offset = 0x4, fixed_abs, tag = 'smem constant byte address 0x4 - core index']
  #allocation1 [shape = 'u32[144,128]{1,0:T(1,128)}', space=vmem, size = 0x12000, scoped, tag = 'internal scratch']
  %s0 = inlined_call_operand.hbm [shape: f32[8], index: 0, kind: input, shape index: {}]
  %s1 = inlined_call_operand.hbm [shape: f32[58,8,128], index: 1, kind: input, shape index: {}]
  %s2 = inlined_call_operand.hbm [shape: f32[25,8,128], index: 2, kind: output, shape index: {}]
  %s3 = sld [smem:[#allocation0]]
  $region26: #{tpu_custom_call.1} parent=0
    _
  %s5 = ssub.s32 1, %s3
  %s6 = scalar_select 0, %s5, %s3
  $region1: #{tpu_custom_call.1} parent=0
    #allocation2 [shape = 'u8[512]{0}', space=smem, size = 0x200, scoped, tag = 'input window, operand 0, single buffered']
    #allocation3 [shape = 's32[1]{0}', space=sflag, size = 0x4, scoped, tag = 'scoped memory for tpu_custom_call.1']
    #allocation4 [shape = 's32[1]{0}', space=sflag, size = 0x4, scoped, tag = 'scoped memory for tpu_custom_call.1']
    #allocation5 [shape = 's32[1]{0}', space=sflag, size = 0x4, scoped, tag = 'scoped memory for tpu_custom_call.1']
    #allocation6 [shape = 'u8[237568]{0}', space=vmem, size = 0x3a000, scoped, tag = 'input window, operand 1, single buffered']
    #allocation7 [shape = 'u8[102400]{0}', space=vmem, size = 0x19000, scoped, tag = 'output window, operand 0, single buffered']
    %7 = vsyncpa [#allocation5], 0
    %8 = vsyncpa [#allocation3], 0
    %9 = vsyncpa [#allocation4], 0
    // Predicated region
    $region2: #{tpu_custom_call.1} parent=1 // pred_check
      _
    $region3: #{tpu_custom_call.1} parent=1 // pred_check_branch
      %11 = sbr.rel (0) target = $region5
    $region4: #{tpu_custom_call.1} parent=1 // pred_region
      %s13 = ssub.s32 16, 16
      %14 = vsyncadd [#allocation5], %s13
      %17 = dma.hbm_to_smem %s0, 16, [#allocation2], [#allocation5]
    $region5: #{tpu_custom_call.1} parent=1 // pred_fallthru
      _
    // Predicated region
    $region6: #{tpu_custom_call.1} parent=1 // pred_check
      _
    $region7: #{tpu_custom_call.1} parent=1 // pred_check_branch
      %19 = sbr.rel (0) target = $region9
    $region8: #{tpu_custom_call.1} parent=1 // pred_region
      %s21 = ssub.s32 7424, 7424
      %22 = vsyncadd [#allocation3], %s21
      %s23 = sshll.u32 [#allocation6], 4
      %s24 = int_to_ptr.vmem [resolvable:$true] %s23
      %29 = dma.hbm_to_vmem [thread:$0]  %s1, 7424, %s24, [#allocation3], 128, 128, 8
    $region9: #{tpu_custom_call.1} parent=1 // pred_fallthru
      _
    // Predicated region
    $region10: #{tpu_custom_call.1} parent=1 // pred_check
      _
    $region11: #{tpu_custom_call.1} parent=1 // pred_check_branch
      %31 = sbr.rel (0) target = $region13
    $region12: #{tpu_custom_call.1} parent=1 // pred_region
      %32 = dma.done [#allocation5], 16
    $region13: #{tpu_custom_call.1} parent=1 // pred_fallthru
      _
    // Predicated region
    $region14: #{tpu_custom_call.1} parent=1 // pred_check
      _
    $region15: #{tpu_custom_call.1} parent=1 // pred_check_branch
      %34 = sbr.rel (0) target = $region17
    $region16: #{tpu_custom_call.1} parent=1 // pred_region
      %35 = dma.done [#allocation3], 7424
    $region17: #{tpu_custom_call.1} parent=1 // pred_fallthru
      _
    %36 = sfence
    %s37 = sld [smem:[#allocation2]]
    %s38 = sld [smem:[#allocation2 + $0x1]]
    %s39 = sld [smem:[#allocation2 + $0x2]]
    %s40 = sld [smem:[#allocation2 + $0x3]]
    %s41 = sld [smem:[#allocation2 + $0x4]]
    %s42 = scalar_lea.vmem [#allocation6], 48
    %v43 = vld [vmem:[%s42] sm:$0xff]
    %s44 = scalar_lea.vmem [#allocation6], 56
    %v45 = vld [vmem:[%s44] sm:$0xff]
    %s46 = scalar_lea.vmem [#allocation6], 64
    %v47 = vld [vmem:[%s46] sm:$0xff]
    %v48 = vand.u32 2147483647, %v43
    %vm49 = vcmp.le.f32.partialorder %v48, 0.7853982
    %vm50 = vcmp.lt.s32.totalorder %v43, 0
    %v51 = vand.u32 %v43, 2139095040
    %v52 = vshrl.u32 %v51, 23
    %v53 = vsub.s32 %v52, 127
    %v54 = vand.u32 2147483647, %v43
    %v55 = vand.u32 %v54, 8388607
    %v56 = vor.u32 %v55, 8388608
    %v57 = vsub.s32 0, %v56
    %v58 = vadd.s32 %v53, 1
    %vm59 = vcmp.gt.s32.totalorder %v58, 0
    %v60 = vsel %vm59, %v58, 0
    %v61 = vshrl.u32 %v60, 5
    %v62 = vand.u32 %v60, 31
    %v63 = vsub.s32 32, %v62
    %v64 = vshrl.u32 683565275, %v63
    %v65 = vshll.u32 683565275, %v62
    %v66 = vshrl.u32 2475754826, %v63
    %v67 = vor.u32 %v65, %v66
    %v68 = vshll.u32 2475754826, %v62
    %v69 = vshrl.u32 2131351028, %v63
    %v70 = vor.u32 %v68, %v69
    %v71 = vshll.u32 2131351028, %v62
    %v72 = vshrl.u32 2102212464, %v63
    %v73 = vor.u32 %v71, %v72
    %v74 = vshll.u32 2102212464, %v62
    %v75 = vshrl.u32 920167782, %v63
    %v76 = vor.u32 %v74, %v75
    %v77 = vshll.u32 920167782, %v62
    %v78 = vshrl.u32 1326507024, %v63
    %v79 = vor.u32 %v77, %v78
    %vm80 = vcmp.lt.s32.totalorder %v61, 1
    %vm81 = vcmp.lt.s32.totalorder %v61, 2
    %vm82 = vcmp.lt.s32.totalorder %v61, 3
    %vm83 = vcmp.lt.s32.totalorder %v61, 4
    %v84 = vsel %vm80, %v64, %v67
    %v85 = vsel %vm83, %v73, 2102212464
    %v86 = vsel %vm82, %v70, %v85
    %v87 = vsel %vm81, %v84, %v86
    %v88 = vsel %vm80, %v67, %v70
    %v89 = vsel %vm83, %v76, 920167782
    %v90 = vsel %vm82, %v73, %v89
    %v91 = vsel %vm81, %v88, %v90
    %v92 = vsel %vm80, %v70, %v73
    %v93 = vsel %vm83, %v79, 1326507024
    %v94 = vsel %vm82, %v76, %v93
    %v95 = vsel %vm81, %v92, %v94
    %v96 = vshll.u32 %v56, 8
    %v97 = vmul.u32.u64.compose %v96, %v95
    %v98 = vextract.low.u32 %v97
    %v99 = vextract.high.u32 %v97
    %v100 = vmul.u32.u64.compose %v96, %v91
    %v101 = vextract.low.u32 %v100
    %v102 = vextract.high.u32 %v100
    %v103 = vmul.u32 %v96, %v87
    %v104 = vadd.s32 %v99, %v101
    %vm105 = vc.u32 %v99, %v101
    %v106 = vadd.s32 %v102, 1
    %v107 = vsel %vm105, %v106, %v102
    %v108 = vadd.s32 %v103, %v107
    %v109 = vadd.s32 %v108, 536870912
    %v110 = vshrl.u32 %v109, 30
    %v111 = vshll.u32 %v110, 30
    %v112 = vsub.s32 %v108, %v111
    %vm113 = vcmp.lt.s32.totalorder %v112, 0
    %v114 = vsub.s32 0, %v112
    %v115 = vsel %vm113, %v114, %v112
    %v116 = vclz %v115
    %v117 = vsub.s32 %v116, 2
    %vm118 = vcmp.gt.s32.totalorder 0, %v117
    %v119 = vsel %vm118, 0, %v117
    %v120 = vsub.s32 32, %v119
    %v121 = vshll.u32 %v112, %v119
    %v122 = vshrl.u32 %v104, %v120
    %v123 = vor.u32 %v121, %v122
    %v124 = vsub.s32 4294967266, %v119
    %v125 = vadd.s32 %v124, 127
    %v126 = vshll.u32 %v125, 23
    %v127 = vor.u32 4788187, %v126
    %v128 = vand.u32 2147483647, %v127
    %v130 = vcvt.s32.f32 %v123
    %v131 = vmul.f32 %v130, %v128
    %v132 = vxor.u32 %v131, 2147483648
    %v133 = vsel %vm50, %v132, %v131
    %v134 = vsub.s32 4, %v110
    %v135 = vsel %vm50, %v134, %v110
    %v136 = vsel %vm49, %v43, %v133
    %v137 = vsel %vm49, 0, %v135
    %v138 = vcosq.f32.pop %v136
    %v139 = vsinq.f32.pop %v136
    %vm140 = vweird.f32 %v43
    %v141 = vand.u32 %v137, 3
    %vm142 = vcmp.lt.s32.totalorder %v141, 2
    %vm143 = vcmp.eq.s32.totalorder %v141, 0
    %v144 = vxor.u32 %v139, 2147483648
    %v145 = vsel %vm143, %v138, %v144
    %vm146 = vcmp.eq.s32.totalorder %v141, 2
    %v147 = vxor.u32 %v138, 2147483648
    %v148 = vsel %vm146, %v147, %v139
    %v149 = vsel %vm142, %v145, %v148
    %v150 = vsel %vm140, nan, %v149
    %v151 = vand.u32 2147483647, %v43
    %vm152 = vcmp.le.f32.partialorder %v151, 0.7853982
    %vm153 = vcmp.lt.s32.totalorder %v43, 0
    %v154 = vand.u32 %v43, 2139095040
    %v155 = vshrl.u32 %v154, 23
    %v156 = vsub.s32 %v155, 127
    %v157 = vand.u32 2147483647, %v43
    %v158 = vand.u32 %v157, 8388607
    %v159 = vor.u32 %v158, 8388608
    %v160 = vsub.s32 0, %v159
    %v161 = vadd.s32 %v156, 1
    %vm162 = vcmp.gt.s32.totalorder %v161, 0
    %v163 = vsel %vm162, %v161, 0
    %v164 = vshrl.u32 %v163, 5
    %v165 = vand.u32 %v163, 31
    %v166 = vsub.s32 32, %v165
    %v167 = vshrl.u32 683565275, %v166
    %v168 = vshll.u32 683565275, %v165
    %v169 = vshrl.u32 2475754826, %v166
    %v170 = vor.u32 %v168, %v169
    %v171 = vshll.u32 2475754826, %v165
    %v172 = vshrl.u32 2131351028, %v166
    %v173 = vor.u32 %v171, %v172
    %v174 = vshll.u32 2131351028, %v165
    %v175 = vshrl.u32 2102212464, %v166
    %v176 = vor.u32 %v174, %v175
    %v177 = vshll.u32 2102212464, %v165
    %v178 = vshrl.u32 920167782, %v166
    %v179 = vor.u32 %v177, %v178
    %v180 = vshll.u32 920167782, %v165
    %v181 = vshrl.u32 1326507024, %v166
    %v182 = vor.u32 %v180, %v181
    %vm183 = vcmp.lt.s32.totalorder %v164, 1
    %vm184 = vcmp.lt.s32.totalorder %v164, 2
    %vm185 = vcmp.lt.s32.totalorder %v164, 3
    %vm186 = vcmp.lt.s32.totalorder %v164, 4
    %v187 = vsel %vm183, %v167, %v170
    %v188 = vsel %vm186, %v176, 2102212464
    %v189 = vsel %vm185, %v173, %v188
    %v190 = vsel %vm184, %v187, %v189
    %v191 = vsel %vm183, %v170, %v173
    %v192 = vsel %vm186, %v179, 920167782
    %v193 = vsel %vm185, %v176, %v192
    %v194 = vsel %vm184, %v191, %v193
    %v195 = vsel %vm183, %v173, %v176
    %v196 = vsel %vm186, %v182, 1326507024
    %v197 = vsel %vm185, %v179, %v196
    %v198 = vsel %vm184, %v195, %v197
    %v199 = vshll.u32 %v159, 8
    %v200 = vmul.u32.u64.compose %v199, %v198
    %v201 = vextract.low.u32 %v200
    %v202 = vextract.high.u32 %v200
    %v203 = vmul.u32.u64.compose %v199, %v194
    %v204 = vextract.low.u32 %v203
    %v205 = vextract.high.u32 %v203
    %v206 = vmul.u32 %v199, %v190
    %v207 = vadd.s32 %v202, %v204
    %vm208 = vc.u32 %v202, %v204
    %v209 = vadd.s32 %v205, 1
    %v210 = vsel %vm208, %v209, %v205
    %v211 = vadd.s32 %v206, %v210
    %v212 = vadd.s32 %v211, 536870912
    %v213 = vshrl.u32 %v212, 30
    %v214 = vshll.u32 %v213, 30
    %v215 = vsub.s32 %v211, %v214
    %vm216 = vcmp.lt.s32.totalorder %v215, 0
    %v217 = vsub.s32 0, %v215
    %v218 = vsel %vm216, %v217, %v215
    %v219 = vclz %v218
    %v220 = vsub.s32 %v219, 2
    %vm221 = vcmp.gt.s32.totalorder 0, %v220
    %v222 = vsel %vm221, 0, %v220
    %v223 = vsub.s32 32, %v222
    %v224 = vshll.u32 %v215, %v222
    %v225 = vshrl.u32 %v207, %v223
    %v226 = vor.u32 %v224, %v225
    %v227 = vsub.s32 4294967266, %v222
    %v228 = vadd.s32 %v227, 127
    %v229 = vshll.u32 %v228, 23
    %v230 = vor.u32 4788187, %v229
    %v231 = vand.u32 2147483647, %v230
    %v233 = vcvt.s32.f32 %v226
    %v234 = vmul.f32 %v233, %v231
    %v235 = vxor.u32 %v234, 2147483648
    %v236 = vsel %vm153, %v235, %v234
    %v237 = vsub.s32 4, %v213
    %v238 = vsel %vm153, %v237, %v213
    %v239 = vsel %vm152, %v43, %v236
    %v240 = vsel %vm152, 0, %v238
    %v241 = vcosq.f32.pop %v239
    %v242 = vsinq.f32.pop %v239
    %vm243 = vweird.f32 %v43
    %v244 = vadd.s32 %v240, 3
    %v245 = vand.u32 %v244, 3
    %vm246 = vcmp.lt.s32.totalorder %v245, 2
    %vm247 = vcmp.eq.s32.totalorder %v245, 0
    %v248 = vxor.u32 %v242, 2147483648
    %v249 = vsel %vm247, %v241, %v248
    %vm250 = vcmp.eq.s32.totalorder %v245, 2
    %v251 = vxor.u32 %v241, 2147483648
    %v252 = vsel %vm250, %v251, %v242
    %v253 = vsel %vm246, %v249, %v252
    %v254 = vsel %vm243, nan, %v253
    %v255 = vand.u32 2147483647, %v45
    %vm256 = vcmp.le.f32.partialorder %v255, 0.7853982
    %vm257 = vcmp.lt.s32.totalorder %v45, 0
    %v258 = vand.u32 %v45, 2139095040
    %v259 = vshrl.u32 %v258, 23
    %v260 = vsub.s32 %v259, 127
    %v261 = vand.u32 2147483647, %v45
    %v262 = vand.u32 %v261, 8388607
    %v263 = vor.u32 %v262, 8388608
    %v264 = vsub.s32 0, %v263
    %v265 = vadd.s32 %v260, 1
    %vm266 = vcmp.gt.s32.totalorder %v265, 0
    %v267 = vsel %vm266, %v265, 0
    %v268 = vshrl.u32 %v267, 5
    %v269 = vand.u32 %v267, 31
    %v270 = vsub.s32 32, %v269
    %v271 = vshrl.u32 683565275, %v270
    %v272 = vshll.u32 683565275, %v269
    %v273 = vshrl.u32 2475754826, %v270
    %v274 = vor.u32 %v272, %v273
    %v275 = vshll.u32 2475754826, %v269
    %v276 = vshrl.u32 2131351028, %v270
    %v277 = vor.u32 %v275, %v276
    %v278 = vshll.u32 2131351028, %v269
    %v279 = vshrl.u32 2102212464, %v270
    %v280 = vor.u32 %v278, %v279
    %v281 = vshll.u32 2102212464, %v269
    %v282 = vshrl.u32 920167782, %v270
    %v283 = vor.u32 %v281, %v282
    %v284 = vshll.u32 920167782, %v269
    %v285 = vshrl.u32 1326507024, %v270
    %v286 = vor.u32 %v284, %v285
    %vm287 = vcmp.lt.s32.totalorder %v268, 1
    %vm288 = vcmp.lt.s32.totalorder %v268, 2
    %vm289 = vcmp.lt.s32.totalorder %v268, 3
    %vm290 = vcmp.lt.s32.totalorder %v268, 4
    %v291 = vsel %vm287, %v271, %v274
    %v292 = vsel %vm290, %v280, 2102212464
    %v293 = vsel %vm289, %v277, %v292
    %v294 = vsel %vm288, %v291, %v293
    %v295 = vsel %vm287, %v274, %v277
    %v296 = vsel %vm290, %v283, 920167782
    %v297 = vsel %vm289, %v280, %v296
    %v298 = vsel %vm288, %v295, %v297
    %v299 = vsel %vm287, %v277, %v280
    %v300 = vsel %vm290, %v286, 1326507024
    %v301 = vsel %vm289, %v283, %v300
    %v302 = vsel %vm288, %v299, %v301
    %v303 = vshll.u32 %v263, 8
    %v304 = vmul.u32.u64.compose %v303, %v302
    %v305 = vextract.low.u32 %v304
    %v306 = vextract.high.u32 %v304
    %v307 = vmul.u32.u64.compose %v303, %v298
    %v308 = vextract.low.u32 %v307
    %v309 = vextract.high.u32 %v307
    %v310 = vmul.u32 %v303, %v294
    %v311 = vadd.s32 %v306, %v308
    %vm312 = vc.u32 %v306, %v308
    %v313 = vadd.s32 %v309, 1
    %v314 = vsel %vm312, %v313, %v309
    %v315 = vadd.s32 %v310, %v314
    %v316 = vadd.s32 %v315, 536870912
    %v317 = vshrl.u32 %v316, 30
    %v318 = vshll.u32 %v317, 30
    %v319 = vsub.s32 %v315, %v318
    %vm320 = vcmp.lt.s32.totalorder %v319, 0
    %v321 = vsub.s32 0, %v319
    %v322 = vsel %vm320, %v321, %v319
    %v323 = vclz %v322
    %v324 = vsub.s32 %v323, 2
    %vm325 = vcmp.gt.s32.totalorder 0, %v324
    %v326 = vsel %vm325, 0, %v324
    %v327 = vsub.s32 32, %v326
    %v328 = vshll.u32 %v319, %v326
    %v329 = vshrl.u32 %v311, %v327
    %v330 = vor.u32 %v328, %v329
    %v331 = vsub.s32 4294967266, %v326
    %v332 = vadd.s32 %v331, 127
    %v333 = vshll.u32 %v332, 23
    %v334 = vor.u32 4788187, %v333
    %v335 = vand.u32 2147483647, %v334
    %v337 = vcvt.s32.f32 %v330
    %v338 = vmul.f32 %v337, %v335
    %v339 = vxor.u32 %v338, 2147483648
    %v340 = vsel %vm257, %v339, %v338
    %v341 = vsub.s32 4, %v317
    %v342 = vsel %vm257, %v341, %v317
    %v343 = vsel %vm256, %v45, %v340
    %v344 = vsel %vm256, 0, %v342
    %v345 = vcosq.f32.pop %v343
    %v346 = vsinq.f32.pop %v343
    %vm347 = vweird.f32 %v45
    %v348 = vand.u32 %v344, 3
    %vm349 = vcmp.lt.s32.totalorder %v348, 2
    %vm350 = vcmp.eq.s32.totalorder %v348, 0
    %v351 = vxor.u32 %v346, 2147483648
    %v352 = vsel %vm350, %v345, %v351
    %vm353 = vcmp.eq.s32.totalorder %v348, 2
    %v354 = vxor.u32 %v345, 2147483648
    %v355 = vsel %vm353, %v354, %v346
    %v356 = vsel %vm349, %v352, %v355
    %v357 = vsel %vm347, nan, %v356
    %v358 = vand.u32 2147483647, %v45
    %vm359 = vcmp.le.f32.partialorder %v358, 0.7853982
    %vm360 = vcmp.lt.s32.totalorder %v45, 0
    %v361 = vand.u32 %v45, 2139095040
    %v362 = vshrl.u32 %v361, 23
    %v363 = vsub.s32 %v362, 127
    %v364 = vand.u32 2147483647, %v45
    %v365 = vand.u32 %v364, 8388607
    %v366 = vor.u32 %v365, 8388608
    %v367 = vsub.s32 0, %v366
    %v368 = vadd.s32 %v363, 1
    %vm369 = vcmp.gt.s32.totalorder %v368, 0
    %v370 = vsel %vm369, %v368, 0
    %v371 = vshrl.u32 %v370, 5
    %v372 = vand.u32 %v370, 31
    %v373 = vsub.s32 32, %v372
    %v374 = vshrl.u32 683565275, %v373
    %v375 = vshll.u32 683565275, %v372
    %v376 = vshrl.u32 2475754826, %v373
    %v377 = vor.u32 %v375, %v376
    %v378 = vshll.u32 2475754826, %v372
    %v379 = vshrl.u32 2131351028, %v373
    %v380 = vor.u32 %v378, %v379
    %v381 = vshll.u32 2131351028, %v372
    %v382 = vshrl.u32 2102212464, %v373
    %v383 = vor.u32 %v381, %v382
    %v384 = vshll.u32 2102212464, %v372
    %v385 = vshrl.u32 920167782, %v373
    %v386 = vor.u32 %v384, %v385
    %v387 = vshll.u32 920167782, %v372
    %v388 = vshrl.u32 1326507024, %v373
    %v389 = vor.u32 %v387, %v388
    %vm390 = vcmp.lt.s32.totalorder %v371, 1
    %vm391 = vcmp.lt.s32.totalorder %v371, 2
    %vm392 = vcmp.lt.s32.totalorder %v371, 3
    %vm393 = vcmp.lt.s32.totalorder %v371, 4
    %v394 = vsel %vm390, %v374, %v377
    %v395 = vsel %vm393, %v383, 2102212464
    %v396 = vsel %vm392, %v380, %v395
    %v397 = vsel %vm391, %v394, %v396
    %v398 = vsel %vm390, %v377, %v380
    %v399 = vsel %vm393, %v386, 920167782
    %v400 = vsel %vm392, %v383, %v399
    %v401 = vsel %vm391, %v398, %v400
    %v402 = vsel %vm390, %v380, %v383
    %v403 = vsel %vm393, %v389, 1326507024
    %v404 = vsel %vm392, %v386, %v403
    %v405 = vsel %vm391, %v402, %v404
    %v406 = vshll.u32 %v366, 8
    %v407 = vmul.u32.u64.compose %v406, %v405
    %v408 = vextract.low.u32 %v407
    %v409 = vextract.high.u32 %v407
    %v410 = vmul.u32.u64.compose %v406, %v401
    %v411 = vextract.low.u32 %v410
    %v412 = vextract.high.u32 %v410
    %v413 = vmul.u32 %v406, %v397
    %v414 = vadd.s32 %v409, %v411
    %vm415 = vc.u32 %v409, %v411
    %v416 = vadd.s32 %v412, 1
    %v417 = vsel %vm415, %v416, %v412
    %v418 = vadd.s32 %v413, %v417
    %v419 = vadd.s32 %v418, 536870912
    %v420 = vshrl.u32 %v419, 30
    %v421 = vshll.u32 %v420, 30
    %v422 = vsub.s32 %v418, %v421
    %vm423 = vcmp.lt.s32.totalorder %v422, 0
    %v424 = vsub.s32 0, %v422
    %v425 = vsel %vm423, %v424, %v422
    %v426 = vclz %v425
    %v427 = vsub.s32 %v426, 2
    %vm428 = vcmp.gt.s32.totalorder 0, %v427
    %v429 = vsel %vm428, 0, %v427
    %v430 = vsub.s32 32, %v429
    %v431 = vshll.u32 %v422, %v429
    %v432 = vshrl.u32 %v414, %v430
    %v433 = vor.u32 %v431, %v432
    %v434 = vsub.s32 4294967266, %v429
    %v435 = vadd.s32 %v434, 127
    %v436 = vshll.u32 %v435, 23
    %v437 = vor.u32 4788187, %v436
    %v438 = vand.u32 2147483647, %v437
    %v440 = vcvt.s32.f32 %v433
    %v441 = vmul.f32 %v440, %v438
    %v442 = vxor.u32 %v441, 2147483648
    %v443 = vsel %vm360, %v442, %v441
    %v444 = vsub.s32 4, %v420
    %v445 = vsel %vm360, %v444, %v420
    %v446 = vsel %vm359, %v45, %v443
    %v447 = vsel %vm359, 0, %v445
    %v448 = vcosq.f32.pop %v446
    %v449 = vsinq.f32.pop %v446
    %vm450 = vweird.f32 %v45
    %v451 = vadd.s32 %v447, 3
    %v452 = vand.u32 %v451, 3
    %vm453 = vcmp.lt.s32.totalorder %v452, 2
    %vm454 = vcmp.eq.s32.totalorder %v452, 0
    %v455 = vxor.u32 %v449, 2147483648
    %v456 = vsel %vm454, %v448, %v455
    %vm457 = vcmp.eq.s32.totalorder %v452, 2
    %v458 = vxor.u32 %v448, 2147483648
    %v459 = vsel %vm457, %v458, %v449
    %v460 = vsel %vm453, %v456, %v459
    %v461 = vsel %vm450, nan, %v460
    %v462 = vand.u32 2147483647, %v47
    %vm463 = vcmp.le.f32.partialorder %v462, 0.7853982
    %vm464 = vcmp.lt.s32.totalorder %v47, 0
    %v465 = vand.u32 %v47, 2139095040
    %v466 = vshrl.u32 %v465, 23
    %v467 = vsub.s32 %v466, 127
    %v468 = vand.u32 2147483647, %v47
    %v469 = vand.u32 %v468, 8388607
    %v470 = vor.u32 %v469, 8388608
    %v471 = vsub.s32 0, %v470
    %v472 = vadd.s32 %v467, 1
    %vm473 = vcmp.gt.s32.totalorder %v472, 0
    %v474 = vsel %vm473, %v472, 0
    %v475 = vshrl.u32 %v474, 5
    %v476 = vand.u32 %v474, 31
    %v477 = vsub.s32 32, %v476
    %v478 = vshrl.u32 683565275, %v477
    %v479 = vshll.u32 683565275, %v476
    %v480 = vshrl.u32 2475754826, %v477
    %v481 = vor.u32 %v479, %v480
    %v482 = vshll.u32 2475754826, %v476
    %v483 = vshrl.u32 2131351028, %v477
    %v484 = vor.u32 %v482, %v483
    %v485 = vshll.u32 2131351028, %v476
    %v486 = vshrl.u32 2102212464, %v477
    %v487 = vor.u32 %v485, %v486
    %v488 = vshll.u32 2102212464, %v476
    %v489 = vshrl.u32 920167782, %v477
    %v490 = vor.u32 %v488, %v489
    %v491 = vshll.u32 920167782, %v476
    %v492 = vshrl.u32 1326507024, %v477
    %v493 = vor.u32 %v491, %v492
    %vm494 = vcmp.lt.s32.totalorder %v475, 1
    %vm495 = vcmp.lt.s32.totalorder %v475, 2
    %vm496 = vcmp.lt.s32.totalorder %v475, 3
    %vm497 = vcmp.lt.s32.totalorder %v475, 4
    %v498 = vsel %vm494, %v478, %v481
    %v499 = vsel %vm497, %v487, 2102212464
    %v500 = vsel %vm496, %v484, %v499
    %v501 = vsel %vm495, %v498, %v500
    %v502 = vsel %vm494, %v481, %v484
    %v503 = vsel %vm497, %v490, 920167782
    %v504 = vsel %vm496, %v487, %v503
    %v505 = vsel %vm495, %v502, %v504
    %v506 = vsel %vm494, %v484, %v487
    %v507 = vsel %vm497, %v493, 1326507024
    %v508 = vsel %vm496, %v490, %v507
    %v509 = vsel %vm495, %v506, %v508
    %v510 = vshll.u32 %v470, 8
    %v511 = vmul.u32.u64.compose %v510, %v509
    %v512 = vextract.low.u32 %v511
    %v513 = vextract.high.u32 %v511
    %v514 = vmul.u32.u64.compose %v510, %v505
    %v515 = vextract.low.u32 %v514
    %v516 = vextract.high.u32 %v514
    %v517 = vmul.u32 %v510, %v501
    %v518 = vadd.s32 %v513, %v515
    %vm519 = vc.u32 %v513, %v515
    %v520 = vadd.s32 %v516, 1
    %v521 = vsel %vm519, %v520, %v516
    %v522 = vadd.s32 %v517, %v521
    %v523 = vadd.s32 %v522, 536870912
    %v524 = vshrl.u32 %v523, 30
    %v525 = vshll.u32 %v524, 30
    %v526 = vsub.s32 %v522, %v525
    %vm527 = vcmp.lt.s32.totalorder %v526, 0
    %v528 = vsub.s32 0, %v526
    %v529 = vsel %vm527, %v528, %v526
    %v530 = vclz %v529
    %v531 = vsub.s32 %v530, 2
    %vm532 = vcmp.gt.s32.totalorder 0, %v531
    %v533 = vsel %vm532, 0, %v531
    %v534 = vsub.s32 32, %v533
    %v535 = vshll.u32 %v526, %v533
    %v536 = vshrl.u32 %v518, %v534
    %v537 = vor.u32 %v535, %v536
    %v538 = vsub.s32 4294967266, %v533
    %v539 = vadd.s32 %v538, 127
    %v540 = vshll.u32 %v539, 23
    %v541 = vor.u32 4788187, %v540
    %v542 = vand.u32 2147483647, %v541
    %v544 = vcvt.s32.f32 %v537
    %v545 = vmul.f32 %v544, %v542
    %v546 = vxor.u32 %v545, 2147483648
    %v547 = vsel %vm464, %v546, %v545
    %v548 = vsub.s32 4, %v524
    %v549 = vsel %vm464, %v548, %v524
    %v550 = vsel %vm463, %v47, %v547
    %v551 = vsel %vm463, 0, %v549
    %v552 = vcosq.f32.pop %v550
    %v553 = vsinq.f32.pop %v550
    %vm554 = vweird.f32 %v47
    %v555 = vand.u32 %v551, 3
    %vm556 = vcmp.lt.s32.totalorder %v555, 2
    %vm557 = vcmp.eq.s32.totalorder %v555, 0
    %v558 = vxor.u32 %v553, 2147483648
    %v559 = vsel %vm557, %v552, %v558
    %vm560 = vcmp.eq.s32.totalorder %v555, 2
    %v561 = vxor.u32 %v552, 2147483648
    %v562 = vsel %vm560, %v561, %v553
    %v563 = vsel %vm556, %v559, %v562
    %v564 = vsel %vm554, nan, %v563
    %v565 = vand.u32 2147483647, %v47
    %vm566 = vcmp.le.f32.partialorder %v565, 0.7853982
    %vm567 = vcmp.lt.s32.totalorder %v47, 0
    %v568 = vand.u32 %v47, 2139095040
    %v569 = vshrl.u32 %v568, 23
    %v570 = vsub.s32 %v569, 127
    %v571 = vand.u32 2147483647, %v47
    %v572 = vand.u32 %v571, 8388607
    %v573 = vor.u32 %v572, 8388608
    %v574 = vsub.s32 0, %v573
    %v575 = vadd.s32 %v570, 1
    %vm576 = vcmp.gt.s32.totalorder %v575, 0
    %v577 = vsel %vm576, %v575, 0
    %v578 = vshrl.u32 %v577, 5
    %v579 = vand.u32 %v577, 31
    %v580 = vsub.s32 32, %v579
    %v581 = vshrl.u32 683565275, %v580
    %v582 = vshll.u32 683565275, %v579
    %v583 = vshrl.u32 2475754826, %v580
    %v584 = vor.u32 %v582, %v583
    %v585 = vshll.u32 2475754826, %v579
    %v586 = vshrl.u32 2131351028, %v580
    %v587 = vor.u32 %v585, %v586
    %v588 = vshll.u32 2131351028, %v579
    %v589 = vshrl.u32 2102212464, %v580
    %v590 = vor.u32 %v588, %v589
    %v591 = vshll.u32 2102212464, %v579
    %v592 = vshrl.u32 920167782, %v580
    %v593 = vor.u32 %v591, %v592
    %v594 = vshll.u32 920167782, %v579
    %v595 = vshrl.u32 1326507024, %v580
    %v596 = vor.u32 %v594, %v595
    %vm597 = vcmp.lt.s32.totalorder %v578, 1
    %vm598 = vcmp.lt.s32.totalorder %v578, 2
    %vm599 = vcmp.lt.s32.totalorder %v578, 3
    %vm600 = vcmp.lt.s32.totalorder %v578, 4
    %v601 = vsel %vm597, %v581, %v584
    %v602 = vsel %vm600, %v590, 2102212464
    %v603 = vsel %vm599, %v587, %v602
    %v604 = vsel %vm598, %v601, %v603
    %v605 = vsel %vm597, %v584, %v587
    %v606 = vsel %vm600, %v593, 920167782
    %v607 = vsel %vm599, %v590, %v606
    %v608 = vsel %vm598, %v605, %v607
    %v609 = vsel %vm597, %v587, %v590
    %v610 = vsel %vm600, %v596, 1326507024
    %v611 = vsel %vm599, %v593, %v610
    %v612 = vsel %vm598, %v609, %v611
    %v613 = vshll.u32 %v573, 8
    %v614 = vmul.u32.u64.compose %v613, %v612
    %v615 = vextract.low.u32 %v614
    %v616 = vextract.high.u32 %v614
    %v617 = vmul.u32.u64.compose %v613, %v608
    %v618 = vextract.low.u32 %v617
    %v619 = vextract.high.u32 %v617
    %v620 = vmul.u32 %v613, %v604
    %v621 = vadd.s32 %v616, %v618
    %vm622 = vc.u32 %v616, %v618
    %v623 = vadd.s32 %v619, 1
    %v624 = vsel %vm622, %v623, %v619
    %v625 = vadd.s32 %v620, %v624
    %v626 = vadd.s32 %v625, 536870912
    %v627 = vshrl.u32 %v626, 30
    %v628 = vshll.u32 %v627, 30
    %v629 = vsub.s32 %v625, %v628
    %vm630 = vcmp.lt.s32.totalorder %v629, 0
    %v631 = vsub.s32 0, %v629
    %v632 = vsel %vm630, %v631, %v629
    %v633 = vclz %v632
    %v634 = vsub.s32 %v633, 2
    %vm635 = vcmp.gt.s32.totalorder 0, %v634
    %v636 = vsel %vm635, 0, %v634
    %v637 = vsub.s32 32, %v636
    %v638 = vshll.u32 %v629, %v636
    %v639 = vshrl.u32 %v621, %v637
    %v640 = vor.u32 %v638, %v639
    %v641 = vsub.s32 4294967266, %v636
    %v642 = vadd.s32 %v641, 127
    %v643 = vshll.u32 %v642, 23
    %v644 = vor.u32 4788187, %v643
    %v645 = vand.u32 2147483647, %v644
    %v647 = vcvt.s32.f32 %v640
    %v648 = vmul.f32 %v647, %v645
    %v649 = vxor.u32 %v648, 2147483648
    %v650 = vsel %vm567, %v649, %v648
    %v651 = vsub.s32 4, %v627
    %v652 = vsel %vm567, %v651, %v627
    %v653 = vsel %vm566, %v47, %v650
    %v654 = vsel %vm566, 0, %v652
    %v655 = vcosq.f32.pop %v653
    %v656 = vsinq.f32.pop %v653
    %vm657 = vweird.f32 %v47
    %v658 = vadd.s32 %v654, 3
    %v659 = vand.u32 %v658, 3
    %vm660 = vcmp.lt.s32.totalorder %v659, 2
    %vm661 = vcmp.eq.s32.totalorder %v659, 0
    %v662 = vxor.u32 %v656, 2147483648
    %v663 = vsel %vm661, %v655, %v662
    %vm664 = vcmp.eq.s32.totalorder %v659, 2
    %v665 = vxor.u32 %v655, 2147483648
    %v666 = vsel %vm664, %v665, %v656
    %v667 = vsel %vm660, %v663, %v666
    %v668 = vsel %vm657, nan, %v667
    %v669 = vmul.f32 %v564, %v357
    %v670 = vmul.f32 %v564, %v461
    %v671 = vmul.f32 %v670, %v254
    %v672 = vmul.f32 %v668, %v150
    %v673 = vsub.f32 %v671, %v672
    %v674 = vmul.f32 %v670, %v150
    %v675 = vmul.f32 %v668, %v254
    %v676 = vadd.f32 %v674, %v675
    %v677 = vmul.f32 %v668, %v357
    %v678 = vmul.f32 %v668, %v461
    %v679 = vmul.f32 %v678, %v254
    %v680 = vmul.f32 %v564, %v150
    %v681 = vadd.f32 %v679, %v680
    %v682 = vmul.f32 %v678, %v150
    %v683 = vmul.f32 %v564, %v254
    %v684 = vsub.f32 %v682, %v683
    %v685 = vsub.f32 0.0, %v461
    %v686 = vmul.f32 %v357, %v254
    %v687 = vmul.f32 %v357, %v150
    %s688 = scalar_lea.vmem [#allocation6], 24
    %v689 = vld [vmem:[%s688] sm:$0xff]
    %s690 = scalar_lea.vmem [#allocation6], 32
    %v691 = vld [vmem:[%s690] sm:$0xff]
    %s692 = scalar_lea.vmem [#allocation6], 40
    %v693 = vld [vmem:[%s692] sm:$0xff]
    %v694 = vmul.f32 %v669, %v689
    %v695 = vmul.f32 %v673, %v691
    %v696 = vadd.f32 %v694, %v695
    %v697 = vmul.f32 %v676, %v693
    %v698 = vadd.f32 %v696, %v697
    %v699 = vstv %s37
    %v700 = vmul.f32 %v698, %v699
    %v701 = vmul.f32 %v677, %v689
    %v702 = vmul.f32 %v681, %v691
    %v703 = vadd.f32 %v701, %v702
    %v704 = vmul.f32 %v684, %v693
    %v705 = vadd.f32 %v703, %v704
    %v706 = vmul.f32 %v705, %v699
    %v707 = vmul.f32 %v685, %v689
    %v708 = vmul.f32 %v686, %v691
    %v709 = vadd.f32 %v707, %v708
    %v710 = vmul.f32 %v687, %v693
    %v711 = vadd.f32 %v709, %v710
    %v712 = vsub.f32 %v711, 9.81
    %v713 = vmul.f32 %v712, %v699
    %s714 = scalar_lea.vmem [#allocation6], 168
    %v715 = vld [vmem:[%s714] sm:$0xff]
    %v716 = vld [vmem:[%s714 + $0x8] sm:$0xff]
    %v717 = vld [vmem:[%s714 + $0x10] sm:$0xff]
    %v718 = vld [vmem:[%s714 + $0x18] sm:$0xff]
    %vm719 = vcmp.gt.f32.partialorder %v715, 0.5
    %vm720 = vcmp.gt.f32.partialorder %v716, 0.5
    %vm721 = vcmp.gt.f32.partialorder %v717, 0.5
    %vm722 = vcmp.gt.f32.partialorder %v718, 0.5
    %v723 = vadd.f32 %v715, %v716
    %v724 = vadd.f32 %v723, %v717
    %v725 = vadd.f32 %v724, %v718
    %vm726 = vcmp.gt.f32.partialorder %v725, 0.5
    %v727 = vsel %vm726, 1, 0
    %v728 = vcvt.s32.f32 %v727
    %v729 = vsub.f32 1.0, %v728
    %vm730 = vcmp.gt.f32.partialorder %v725, 3.5
    %vm731 = vcmp.gt.f32.partialorder %v725, 2.5
    %vm732 = vcmp.gt.f32.partialorder %v725, 1.5
    %v733 = vsel %vm732, 0.5, 1.0
    %v734 = vsel %vm731, 0.33333334, %v733
    %v735 = vsel %vm730, 0.25, %v734
    %v736 = vld [vmem:[#allocation6] sm:$0xff]
    %s737 = scalar_lea.vmem [#allocation6], 8
    %v738 = vld [vmem:[%s737] sm:$0xff]
    %s739 = scalar_lea.vmem [#allocation6], 16
    %v740 = vld [vmem:[%s739] sm:$0xff]
    %s741 = scalar_lea.vmem [#allocation6], 272
    %v742 = vld [vmem:[%s741] sm:$0xff]
    %v743 = vld [vmem:[%s741 + $0x8] sm:$0xff]
    %v744 = vld [vmem:[%s741 + $0x10] sm:$0xff]
    %v745 = vld [vmem:[%s741 + $0x18] sm:$0xff]
    %s746 = scalar_lea.vmem [#allocation6], 304
    %v747 = vld [vmem:[%s746] sm:$0xff]
    %v748 = vld [vmem:[%s746 + $0x8] sm:$0xff]
    %v749 = vld [vmem:[%s746 + $0x10] sm:$0xff]
    %v750 = vld [vmem:[%s746 + $0x18] sm:$0xff]
    %s751 = scalar_lea.vmem [#allocation6], 336
    %v752 = vld [vmem:[%s751] sm:$0xff]
    %v753 = vld [vmem:[%s751 + $0x8] sm:$0xff]
    %v754 = vld [vmem:[%s751 + $0x10] sm:$0xff]
    %v755 = vld [vmem:[%s751 + $0x18] sm:$0xff]
    %s756 = scalar_lea.vmem [#allocation6], 368
    %v757 = vld [vmem:[%s756] sm:$0xff]
    %v758 = vld [vmem:[%s756 + $0x8] sm:$0xff]
    %v759 = vld [vmem:[%s756 + $0x10] sm:$0xff]
    %v760 = vld [vmem:[%s756 + $0x18] sm:$0xff]
    %s761 = scalar_lea.vmem [#allocation6], 400
    %v762 = vld [vmem:[%s761] sm:$0xff]
    %v763 = vld [vmem:[%s761 + $0x8] sm:$0xff]
    %v764 = vld [vmem:[%s761 + $0x10] sm:$0xff]
    %v765 = vld [vmem:[%s761 + $0x18] sm:$0xff]
    %s766 = scalar_lea.vmem [#allocation6], 432
    %v767 = vld [vmem:[%s766] sm:$0xff]
    %v768 = vld [vmem:[%s766 + $0x8] sm:$0xff]
    %v769 = vld [vmem:[%s766 + $0x10] sm:$0xff]
    %v770 = vld [vmem:[%s766 + $0x18] sm:$0xff]
    %v771 = vmul.f32 %v738, %v767
    %v772 = vmul.f32 %v738, %v768
    %v773 = vmul.f32 %v738, %v769
    %v774 = vmul.f32 %v738, %v770
    %v775 = vmul.f32 %v740, %v762
    %v776 = vmul.f32 %v740, %v763
    %v777 = vmul.f32 %v740, %v764
    %v778 = vmul.f32 %v740, %v765
    %v779 = vsub.f32 %v771, %v775
    %v780 = vsub.f32 %v772, %v776
    %v781 = vsub.f32 %v773, %v777
    %v782 = vsub.f32 %v774, %v778
    %v783 = vadd.f32 %v742, %v779
    %v784 = vadd.f32 %v743, %v780
    %v785 = vadd.f32 %v744, %v781
    %v786 = vadd.f32 %v745, %v782
    %v787 = vsel %vm719, %v783, 0.0
    %v788 = vsel %vm720, %v784, 0.0
    %v789 = vsel %vm721, %v785, 0.0
    %v790 = vsel %vm722, %v786, 0.0
    %v791 = vmul.f32 %v740, %v757
    %v792 = vmul.f32 %v740, %v758
    %v793 = vmul.f32 %v740, %v759
    %v794 = vmul.f32 %v740, %v760
    %v795 = vmul.f32 %v736, %v767
    %v796 = vmul.f32 %v736, %v768
    %v797 = vmul.f32 %v736, %v769
    %v798 = vmul.f32 %v736, %v770
    %v799 = vsub.f32 %v791, %v795
    %v800 = vsub.f32 %v792, %v796
    %v801 = vsub.f32 %v793, %v797
    %v802 = vsub.f32 %v794, %v798
    %v803 = vadd.f32 %v747, %v799
    %v804 = vadd.f32 %v748, %v800
    %v805 = vadd.f32 %v749, %v801
    %v806 = vadd.f32 %v750, %v802
    %v807 = vsel %vm719, %v803, 0.0
    %v808 = vsel %vm720, %v804, 0.0
    %v809 = vsel %vm721, %v805, 0.0
    %v810 = vsel %vm722, %v806, 0.0
    %v811 = vmul.f32 %v736, %v762
    %v812 = vmul.f32 %v736, %v763
    %v813 = vmul.f32 %v736, %v764
    %v814 = vmul.f32 %v736, %v765
    %v815 = vmul.f32 %v738, %v757
    %v816 = vmul.f32 %v738, %v758
    %v817 = vmul.f32 %v738, %v759
    %v818 = vmul.f32 %v738, %v760
    %v819 = vsub.f32 %v811, %v815
    %v820 = vsub.f32 %v812, %v816
    %v821 = vsub.f32 %v813, %v817
    %v822 = vsub.f32 %v814, %v818
    %v823 = vadd.f32 %v752, %v819
    %v824 = vadd.f32 %v753, %v820
    %v825 = vadd.f32 %v754, %v821
    %v826 = vadd.f32 %v755, %v822
    %v827 = vsel %vm719, %v823, 0.0
    %v828 = vsel %vm720, %v824, 0.0
    %v829 = vsel %vm721, %v825, 0.0
    %v830 = vsel %vm722, %v826, 0.0
    %v831 = vmul.f32 %v669, %v787
    %v832 = vmul.f32 %v669, %v788
    %v833 = vmul.f32 %v669, %v789
    %v834 = vmul.f32 %v669, %v790
    %v835 = vmul.f32 %v673, %v807
    %v836 = vmul.f32 %v673, %v808
    %v837 = vmul.f32 %v673, %v809
    %v838 = vmul.f32 %v673, %v810
    %v839 = vadd.f32 %v831, %v835
    %v840 = vadd.f32 %v832, %v836
    %v841 = vadd.f32 %v833, %v837
    %v842 = vadd.f32 %v834, %v838
    %v843 = vmul.f32 %v676, %v827
    %v844 = vmul.f32 %v676, %v828
    %v845 = vmul.f32 %v676, %v829
    %v846 = vmul.f32 %v676, %v830
    %v847 = vadd.f32 %v839, %v843
    %v848 = vadd.f32 %v840, %v844
    %v849 = vadd.f32 %v841, %v845
    %v850 = vadd.f32 %v842, %v846
    %v851 = vadd.f32 %v847, %v848
    %v852 = vadd.f32 %v851, %v849
    %v853 = vadd.f32 %v852, %v850
    %v854 = vsub.f32 0.0, %v853
    %v855 = vmul.f32 %v677, %v787
    %v856 = vmul.f32 %v677, %v788
    %v857 = vmul.f32 %v677, %v789
    %v858 = vmul.f32 %v677, %v790
    %v859 = vmul.f32 %v681, %v807
    %v860 = vmul.f32 %v681, %v808
    %v861 = vmul.f32 %v681, %v809
    %v862 = vmul.f32 %v681, %v810
    %v863 = vadd.f32 %v855, %v859
    %v864 = vadd.f32 %v856, %v860
    %v865 = vadd.f32 %v857, %v861
    %v866 = vadd.f32 %v858, %v862
    %v867 = vmul.f32 %v684, %v827
    %v868 = vmul.f32 %v684, %v828
    %v869 = vmul.f32 %v684, %v829
    %v870 = vmul.f32 %v684, %v830
    %v871 = vadd.f32 %v863, %v867
    %v872 = vadd.f32 %v864, %v868
    %v873 = vadd.f32 %v865, %v869
    %v874 = vadd.f32 %v866, %v870
    %v875 = vadd.f32 %v871, %v872
    %v876 = vadd.f32 %v875, %v873
    %v877 = vadd.f32 %v876, %v874
    %v878 = vsub.f32 0.0, %v877
    %v879 = vmul.f32 %v685, %v787
    %v880 = vmul.f32 %v685, %v788
    %v881 = vmul.f32 %v685, %v789
    %v882 = vmul.f32 %v685, %v790
    %v883 = vmul.f32 %v686, %v807
    %v884 = vmul.f32 %v686, %v808
    %v885 = vmul.f32 %v686, %v809
    %v886 = vmul.f32 %v686, %v810
    %v887 = vadd.f32 %v879, %v883
    %v888 = vadd.f32 %v880, %v884
    %v889 = vadd.f32 %v881, %v885
    %v890 = vadd.f32 %v882, %v886
    %v891 = vmul.f32 %v687, %v827
    %v892 = vmul.f32 %v687, %v828
    %v893 = vmul.f32 %v687, %v829
    %v894 = vmul.f32 %v687, %v830
    %v895 = vadd.f32 %v887, %v891
    %v896 = vadd.f32 %v888, %v892
    %v897 = vadd.f32 %v889, %v893
    %v898 = vadd.f32 %v890, %v894
    %v899 = vadd.f32 %v895, %v896
    %v900 = vadd.f32 %v899, %v897
    %v901 = vadd.f32 %v900, %v898
    %v902 = vsub.f32 0.0, %v901
    %v903 = vmul.f32 %v854, %v735
    %s904 = scalar_lea.vmem [#allocation6], 72
    %v905 = vld [vmem:[%s904] sm:$0xff]
    %v906 = vsel %vm726, %v903, %v905
    %v907 = vmul.f32 %v878, %v735
    %s908 = scalar_lea.vmem [#allocation6], 80
    %v909 = vld [vmem:[%s908] sm:$0xff]
    %v910 = vsel %vm726, %v907, %v909
    %v911 = vmul.f32 %v902, %v735
    %s912 = scalar_lea.vmem [#allocation6], 88
    %v913 = vld [vmem:[%s912] sm:$0xff]
    %v914 = vsel %vm726, %v911, %v913
    %s915 = scalar_lea.vmem [#allocation6], 96
    %v916 = vld [vmem:[%s915] sm:$0xff]
    %v917 = vadd.f32 %v916, %v700
    %s918 = scalar_lea.vmem [#allocation6], 104
    %v919 = vld [vmem:[%s918] sm:$0xff]
    %v920 = vadd.f32 %v919, %v706
    %s921 = scalar_lea.vmem [#allocation6], 112
    %v922 = vld [vmem:[%s921] sm:$0xff]
    %v923 = vadd.f32 %v922, %v713
    %s924 = scalar_lea.vmem [#allocation6], 200
    %v925 = vld [vmem:[%s924] sm:$0xff]
    %v926 = vstv %s40
    %v927 = vadd.f32 %v925, %v926
    %s928 = scalar_lea.vmem [#allocation6], 208
    %v929 = vld [vmem:[%s928] sm:$0xff]
    %s930 = scalar_lea.vmem [#allocation6], 216
    %v931 = vld [vmem:[%s930] sm:$0xff]
    %s932 = scalar_lea.vmem [#allocation6], 224
    %v933 = vld [vmem:[%s932] sm:$0xff]
    %s934 = scalar_lea.vmem [#allocation6], 232
    %v935 = vld [vmem:[%s934] sm:$0xff]
    %v936 = vadd.f32 %v935, %v926
    %s937 = scalar_lea.vmem [#allocation6], 240
    %v938 = vld [vmem:[%s937] sm:$0xff]
    %s939 = scalar_lea.vmem [#allocation6], 248
    %v940 = vld [vmem:[%s939] sm:$0xff]
    %s941 = scalar_lea.vmem [#allocation6], 256
    %v942 = vld [vmem:[%s941] sm:$0xff]
    %s943 = scalar_lea.vmem [#allocation6], 264
    %v944 = vld [vmem:[%s943] sm:$0xff]
    %v945 = vadd.f32 %v944, %v926
    %v946 = vstv %s41
    %v947 = vadd.f32 %v927, %v946
    %v948 = vadd.f32 %v936, %v946
    %v949 = vadd.f32 %v945, %v946
    %v950 = vmul.f32 %v948, %v949
    %v951 = vmul.f32 %v938, %v942
    %v952 = vsub.f32 %v950, %v951
    %v953 = vmul.f32 %v938, %v940
    %v954 = vmul.f32 %v933, %v949
    %v955 = vsub.f32 %v953, %v954
    %v956 = vmul.f32 %v933, %v942
    %v957 = vmul.f32 %v948, %v940
    %v958 = vsub.f32 %v956, %v957
    %v959 = vmul.f32 %v947, %v952
    %v960 = vmul.f32 %v929, %v955
    %v961 = vadd.f32 %v959, %v960
    %v962 = vmul.f32 %v931, %v958
    %v963 = vadd.f32 %v961, %v962
    %v964 = vrcp.pop %v963
    %v965 = vmul.f32 %v963, %v964
    %v966 = vsub.f32 2.0, %v965
    %v967 = vmul.f32 %v964, %v966
    %v968 = vmul.f32 %v952, %v967
    %v969 = vmul.f32 %v931, %v942
    %v970 = vmul.f32 %v929, %v949
    %v971 = vsub.f32 %v969, %v970
    %v972 = vmul.f32 %v971, %v967
    %v973 = vmul.f32 %v929, %v938
    %v974 = vmul.f32 %v931, %v948
    %v975 = vsub.f32 %v973, %v974
    %v976 = vmul.f32 %v975, %v967
    %v977 = vmul.f32 %v955, %v967
    %v978 = vmul.f32 %v947, %v949
    %v979 = vmul.f32 %v931, %v940
    %v980 = vsub.f32 %v978, %v979
    %v981 = vmul.f32 %v980, %v967
    %v982 = vmul.f32 %v931, %v933
    %v983 = vmul.f32 %v947, %v938
    %v984 = vsub.f32 %v982, %v983
    %v985 = vmul.f32 %v984, %v967
    %v986 = vmul.f32 %v958, %v967
    %v987 = vmul.f32 %v929, %v940
    %v988 = vmul.f32 %v947, %v942
    %v989 = vsub.f32 %v987, %v988
    %v990 = vmul.f32 %v989, %v967
    %v991 = vmul.f32 %v947, %v948
    %v992 = vmul.f32 %v929, %v933
    %v993 = vsub.f32 %v991, %v992
    %v994 = vmul.f32 %v993, %v967
    %v995 = vsub.f32 %v906, %v917
    %v996 = vsub.f32 %v910, %v920
    %v997 = vsub.f32 %v914, %v923
    %v998 = vmul.f32 %v968, %v995
    %v999 = vmul.f32 %v972, %v996
    %v1000 = vadd.f32 %v998, %v999
    %v1001 = vmul.f32 %v976, %v997
    %v1002 = vadd.f32 %v1000, %v1001
    %v1003 = vmul.f32 %v977, %v995
    %v1004 = vmul.f32 %v981, %v996
    %v1005 = vadd.f32 %v1003, %v1004
    %v1006 = vmul.f32 %v985, %v997
    %v1007 = vadd.f32 %v1005, %v1006
    %v1008 = vmul.f32 %v986, %v995
    %v1009 = vmul.f32 %v990, %v996
    %v1010 = vadd.f32 %v1008, %v1009
    %v1011 = vmul.f32 %v994, %v997
    %v1012 = vadd.f32 %v1010, %v1011
    %v1013 = vmul.f32 %v927, %v1002
    %v1014 = vadd.f32 %v917, %v1013
    %v1015 = vmul.f32 %v929, %v1007
    %v1016 = vadd.f32 %v1014, %v1015
    %v1017 = vmul.f32 %v931, %v1012
    %v1018 = vadd.f32 %v1016, %v1017
    %v1019 = vmul.f32 %v933, %v1002
    %v1020 = vadd.f32 %v920, %v1019
    %v1021 = vmul.f32 %v936, %v1007
    %v1022 = vadd.f32 %v1020, %v1021
    %v1023 = vmul.f32 %v938, %v1012
    %v1024 = vadd.f32 %v1022, %v1023
    %v1025 = vmul.f32 %v940, %v1002
    %v1026 = vadd.f32 %v923, %v1025
    %v1027 = vmul.f32 %v942, %v1007
    %v1028 = vadd.f32 %v1026, %v1027
    %v1029 = vmul.f32 %v945, %v1012
    %v1030 = vadd.f32 %v1028, %v1029
    %v1031 = vmul.f32 %v968, %v927
    %v1032 = vmul.f32 %v972, %v933
    %v1033 = vadd.f32 %v1031, %v1032
    %v1034 = vmul.f32 %v976, %v940
    %v1035 = vadd.f32 %v1033, %v1034
    %v1036 = vmul.f32 %v968, %v929
    %v1037 = vmul.f32 %v972, %v936
    %v1038 = vadd.f32 %v1036, %v1037
    %v1039 = vmul.f32 %v976, %v942
    %v1040 = vadd.f32 %v1038, %v1039
    %v1041 = vmul.f32 %v968, %v931
    %v1042 = vmul.f32 %v972, %v938
    %v1043 = vadd.f32 %v1041, %v1042
    %v1044 = vmul.f32 %v976, %v945
    %v1045 = vadd.f32 %v1043, %v1044
    %v1046 = vmul.f32 %v977, %v927
    %v1047 = vmul.f32 %v981, %v933
    %v1048 = vadd.f32 %v1046, %v1047
    %v1049 = vmul.f32 %v985, %v940
    %v1050 = vadd.f32 %v1048, %v1049
    %v1051 = vmul.f32 %v977, %v929
    %v1052 = vmul.f32 %v981, %v936
    %v1053 = vadd.f32 %v1051, %v1052
    %v1054 = vmul.f32 %v985, %v942
    %v1055 = vadd.f32 %v1053, %v1054
    %v1056 = vmul.f32 %v977, %v931
    %v1057 = vmul.f32 %v981, %v938
    %v1058 = vadd.f32 %v1056, %v1057
    %v1059 = vmul.f32 %v985, %v945
    %v1060 = vadd.f32 %v1058, %v1059
    %v1061 = vmul.f32 %v986, %v927
    %v1062 = vmul.f32 %v990, %v933
    %v1063 = vadd.f32 %v1061, %v1062
    %v1064 = vmul.f32 %v994, %v940
    %v1065 = vadd.f32 %v1063, %v1064
    %v1066 = vmul.f32 %v986, %v929
    %v1067 = vmul.f32 %v990, %v936
    %v1068 = vadd.f32 %v1066, %v1067
    %v1069 = vmul.f32 %v994, %v942
    %v1070 = vadd.f32 %v1068, %v1069
    %v1071 = vmul.f32 %v986, %v931
    %v1072 = vmul.f32 %v990, %v938
    %v1073 = vadd.f32 %v1071, %v1072
    %v1074 = vmul.f32 %v994, %v945
    %v1075 = vadd.f32 %v1073, %v1074
    %v1076 = vmul.f32 %v927, %v1035
    %v1077 = vmul.f32 %v929, %v1050
    %v1078 = vadd.f32 %v1076, %v1077
    %v1079 = vmul.f32 %v931, %v1065
    %v1080 = vadd.f32 %v1078, %v1079
    %v1081 = vsub.f32 %v927, %v1080
    %s1082 = scalar_lea.vmem [#allocation7], 56
    %1083 = vst [vmem:[%s1082] sm:$0xff] %v1081
    %v1084 = vmul.f32 %v927, %v1040
    %v1085 = vmul.f32 %v929, %v1055
    %v1086 = vadd.f32 %v1084, %v1085
    %v1087 = vmul.f32 %v931, %v1070
    %v1088 = vadd.f32 %v1086, %v1087
    %v1089 = vsub.f32 %v929, %v1088
    %s1090 = scalar_lea.vmem [#allocation7], 64
    %1091 = vst [vmem:[%s1090] sm:$0xff] %v1089
    %v1092 = vmul.f32 %v927, %v1045
    %v1093 = vmul.f32 %v929, %v1060
    %v1094 = vadd.f32 %v1092, %v1093
    %v1095 = vmul.f32 %v931, %v1075
    %v1096 = vadd.f32 %v1094, %v1095
    %v1097 = vsub.f32 %v931, %v1096
    %s1098 = scalar_lea.vmem [#allocation7], 72
    %1099 = vst [vmem:[%s1098] sm:$0xff] %v1097
    %v1100 = vmul.f32 %v933, %v1035
    %v1101 = vmul.f32 %v936, %v1050
    %v1102 = vadd.f32 %v1100, %v1101
    %v1103 = vmul.f32 %v938, %v1065
    %v1104 = vadd.f32 %v1102, %v1103
    %v1105 = vsub.f32 %v933, %v1104
    %s1106 = scalar_lea.vmem [#allocation7], 80
    %1107 = vst [vmem:[%s1106] sm:$0xff] %v1105
    %v1108 = vmul.f32 %v933, %v1040
    %v1109 = vmul.f32 %v936, %v1055
    %v1110 = vadd.f32 %v1108, %v1109
    %v1111 = vmul.f32 %v938, %v1070
    %v1112 = vadd.f32 %v1110, %v1111
    %v1113 = vsub.f32 %v936, %v1112
    %s1114 = scalar_lea.vmem [#allocation7], 88
    %1115 = vst [vmem:[%s1114] sm:$0xff] %v1113
    %v1116 = vmul.f32 %v933, %v1045
    %v1117 = vmul.f32 %v936, %v1060
    %v1118 = vadd.f32 %v1116, %v1117
    %v1119 = vmul.f32 %v938, %v1075
    %v1120 = vadd.f32 %v1118, %v1119
    %v1121 = vsub.f32 %v938, %v1120
    %s1122 = scalar_lea.vmem [#allocation7], 96
    %1123 = vst [vmem:[%s1122] sm:$0xff] %v1121
    %v1124 = vmul.f32 %v940, %v1035
    %v1125 = vmul.f32 %v942, %v1050
    %v1126 = vadd.f32 %v1124, %v1125
    %v1127 = vmul.f32 %v945, %v1065
    %v1128 = vadd.f32 %v1126, %v1127
    %v1129 = vsub.f32 %v940, %v1128
    %s1130 = scalar_lea.vmem [#allocation7], 104
    %1131 = vst [vmem:[%s1130] sm:$0xff] %v1129
    %v1132 = vmul.f32 %v940, %v1040
    %v1133 = vmul.f32 %v942, %v1055
    %v1134 = vadd.f32 %v1132, %v1133
    %v1135 = vmul.f32 %v945, %v1070
    %v1136 = vadd.f32 %v1134, %v1135
    %v1137 = vsub.f32 %v942, %v1136
    %s1138 = scalar_lea.vmem [#allocation7], 112
    %1139 = vst [vmem:[%s1138] sm:$0xff] %v1137
    %v1140 = vmul.f32 %v940, %v1045
    %v1141 = vmul.f32 %v942, %v1060
    %v1142 = vadd.f32 %v1140, %v1141
    %v1143 = vmul.f32 %v945, %v1075
    %v1144 = vadd.f32 %v1142, %v1143
    %v1145 = vsub.f32 %v945, %v1144
    %s1146 = scalar_lea.vmem [#allocation7], 120
    %1147 = vst [vmem:[%s1146] sm:$0xff] %v1145
    %s1148 = scalar_lea.vmem [#allocation7], 32
    %1149 = vst [vmem:[%s1148] sm:$0xff] %v1018
    %s1150 = scalar_lea.vmem [#allocation7], 40
    %1151 = vst [vmem:[%s1150] sm:$0xff] %v1024
    %s1152 = scalar_lea.vmem [#allocation7], 48
    %1153 = vst [vmem:[%s1152] sm:$0xff] %v1030
    %s1154 = scalar_lea.vmem [#allocation6], 120
    %v1155 = vld [vmem:[%s1154] sm:$0xff]
    %s1156 = scalar_lea.vmem [#allocation6], 144
    %v1157 = vld [vmem:[%s1156] sm:$0xff]
    %v1158 = vadd.f32 %v1155, %v1018
    %v1159 = vand.u32 2147483647, %v1155
    %v1160 = vand.u32 2147483647, %v1018
    %vm1161 = vcmp.ge.f32.partialorder %v1159, %v1160
    %v1162 = vsub.f32 %v1155, %v1158
    %v1163 = vadd.f32 %v1162, %v1018
    %v1164 = vsub.f32 %v1018, %v1158
    %v1165 = vadd.f32 %v1164, %v1155
    %v1166 = vsel %vm1161, %v1163, %v1165
    %v1167 = vadd.f32 %v1157, %v1166
    %v1168 = vadd.f32 %v1158, %v1167
    %v1169 = vstv %s39
    %v1170 = vmul.f32 %v1168, %v1169
    %s1171 = scalar_lea.vmem [#allocation6], 128
    %v1172 = vld [vmem:[%s1171] sm:$0xff]
    %s1173 = scalar_lea.vmem [#allocation6], 152
    %v1174 = vld [vmem:[%s1173] sm:$0xff]
    %v1175 = vadd.f32 %v1172, %v1024
    %v1176 = vand.u32 2147483647, %v1172
    %v1177 = vand.u32 2147483647, %v1024
    %vm1178 = vcmp.ge.f32.partialorder %v1176, %v1177
    %v1179 = vsub.f32 %v1172, %v1175
    %v1180 = vadd.f32 %v1179, %v1024
    %v1181 = vsub.f32 %v1024, %v1175
    %v1182 = vadd.f32 %v1181, %v1172
    %v1183 = vsel %vm1178, %v1180, %v1182
    %v1184 = vadd.f32 %v1174, %v1183
    %v1185 = vadd.f32 %v1175, %v1184
    %v1186 = vmul.f32 %v1185, %v1169
    %s1187 = scalar_lea.vmem [#allocation6], 136
    %v1188 = vld [vmem:[%s1187] sm:$0xff]
    %s1189 = scalar_lea.vmem [#allocation6], 160
    %v1190 = vld [vmem:[%s1189] sm:$0xff]
    %v1191 = vadd.f32 %v1188, %v1030
    %v1192 = vand.u32 2147483647, %v1188
    %v1193 = vand.u32 2147483647, %v1030
    %vm1194 = vcmp.ge.f32.partialorder %v1192, %v1193
    %v1195 = vsub.f32 %v1188, %v1191
    %v1196 = vadd.f32 %v1195, %v1030
    %v1197 = vsub.f32 %v1030, %v1191
    %v1198 = vadd.f32 %v1197, %v1188
    %v1199 = vsel %vm1194, %v1196, %v1198
    %v1200 = vadd.f32 %v1190, %v1199
    %v1201 = vadd.f32 %v1191, %v1200
    %v1202 = vmul.f32 %v1201, %v1169
    %s1203 = scalar_lea.vmem [#allocation7], 128
    %1204 = vst [vmem:[%s1203] sm:$0xff] %v1158
    %s1205 = scalar_lea.vmem [#allocation7], 136
    %1206 = vst [vmem:[%s1205] sm:$0xff] %v1175
    %s1207 = scalar_lea.vmem [#allocation7], 144
    %1208 = vst [vmem:[%s1207] sm:$0xff] %v1191
    %s1209 = scalar_lea.vmem [#allocation7], 152
    %1210 = vst [vmem:[%s1209] sm:$0xff] %v1167
    %s1211 = scalar_lea.vmem [#allocation7], 160
    %1212 = vst [vmem:[%s1211] sm:$0xff] %v1184
    %s1213 = scalar_lea.vmem [#allocation7], 168
    %1214 = vst [vmem:[%s1213] sm:$0xff] %v1200
    %s1215 = scalar_lea.vmem [#allocation7], 176
    %1216 = vst [vmem:[%s1215] sm:$0xff] %v1170
    %s1217 = scalar_lea.vmem [#allocation7], 184
    %1218 = vst [vmem:[%s1217] sm:$0xff] %v1186
    %s1219 = scalar_lea.vmem [#allocation7], 192
    %1220 = vst [vmem:[%s1219] sm:$0xff] %v1202
    %v1221 = vmul.f32 %v669, %v1170
    %v1222 = vmul.f32 %v673, %v1186
    %v1223 = vadd.f32 %v1221, %v1222
    %v1224 = vmul.f32 %v676, %v1202
    %v1225 = vadd.f32 %v1223, %v1224
    %1226 = vst [vmem:[#allocation7] sm:$0xff] %v1225
    %v1227 = vmul.f32 %v677, %v1170
    %v1228 = vmul.f32 %v681, %v1186
    %v1229 = vadd.f32 %v1227, %v1228
    %v1230 = vmul.f32 %v684, %v1202
    %v1231 = vadd.f32 %v1229, %v1230
    %s1232 = scalar_lea.vmem [#allocation7], 8
    %1233 = vst [vmem:[%s1232] sm:$0xff] %v1231
    %v1234 = vmul.f32 %v685, %v1170
    %v1235 = vmul.f32 %v686, %v1186
    %v1236 = vadd.f32 %v1234, %v1235
    %v1237 = vmul.f32 %v687, %v1202
    %v1238 = vadd.f32 %v1236, %v1237
    %s1239 = scalar_lea.vmem [#allocation7], 16
    %1240 = vst [vmem:[%s1239] sm:$0xff] %v1238
    %v1241 = vmul.f32 %v685, %v757
    %v1242 = vmul.f32 %v685, %v758
    %v1243 = vmul.f32 %v685, %v759
    %v1244 = vmul.f32 %v685, %v760
    %v1245 = vmul.f32 %v686, %v762
    %v1246 = vmul.f32 %v686, %v763
    %v1247 = vmul.f32 %v686, %v764
    %v1248 = vmul.f32 %v686, %v765
    %v1249 = vadd.f32 %v1241, %v1245
    %v1250 = vadd.f32 %v1242, %v1246
    %v1251 = vadd.f32 %v1243, %v1247
    %v1252 = vadd.f32 %v1244, %v1248
    %v1253 = vmul.f32 %v687, %v767
    %v1254 = vmul.f32 %v687, %v768
    %v1255 = vmul.f32 %v687, %v769
    %v1256 = vmul.f32 %v687, %v770
    %v1257 = vadd.f32 %v1249, %v1253
    %v1258 = vadd.f32 %v1250, %v1254
    %v1259 = vadd.f32 %v1251, %v1255
    %v1260 = vadd.f32 %v1252, %v1256
    %v1261 = vsel %vm719, %v1257, 0.0
    %v1262 = vsel %vm720, %v1258, 0.0
    %v1263 = vsel %vm721, %v1259, 0.0
    %v1264 = vsel %vm722, %v1260, 0.0
    %v1265 = vadd.f32 %v1261, %v1262
    %v1266 = vadd.f32 %v1265, %v1263
    %v1267 = vadd.f32 %v1266, %v1264
    %v1268 = vmul.f32 %v1267, %v735
    %v1269 = vsel %vm726, %v1268, 0.0
    %v1270 = vstv %s38
    %v1271 = vmul.f32 %v729, %v1270
    %v1272 = vmul.f32 %v728, %v1269
    %v1273 = vsub.f32 %v1271, %v1272
    %s1274 = scalar_lea.vmem [#allocation7], 24
    %1275 = vst [vmem:[%s1274] sm:$0xff] %v1273
    // Predicated region
    $region18: #{tpu_custom_call.1} parent=1 // pred_check
      _
    $region19: #{tpu_custom_call.1} parent=1 // pred_check_branch
      %1277 = sbr.rel (0) target = $region21
    $region20: #{tpu_custom_call.1} parent=1 // pred_region
      %s1279 = ssub.s32 3200, 3200
      %1280 = vsyncadd [#allocation4], %s1279
      %s1281 = sshll.u32 [#allocation7], 4
      %s1282 = int_to_ptr.vmem [resolvable:$true] %s1281
      %1287 = dma.vmem_to_hbm [thread:$0]  %s1282, 3200, %s2, [#allocation4], 128, 128, 8
    $region21: #{tpu_custom_call.1} parent=1 // pred_fallthru
      _
    // Predicated region
    $region22: #{tpu_custom_call.1} parent=1 // pred_check
      _
    $region23: #{tpu_custom_call.1} parent=1 // pred_check_branch
      %1289 = sbr.rel (0) target = $region25
    $region24: #{tpu_custom_call.1} parent=1 // pred_region
      %1290 = dma.done [#allocation4], 3200
    $region25: #{tpu_custom_call.1} parent=1 // pred_fallthru
      _
    %1291 = vsyncpa [#allocation3], 1
    %1292 = vsyncpa [#allocation4], 1
    %1293 = vsyncpa [#allocation5], 1

</llo_original>
